<compile_context>
chip_gen: v5e
topology: v5e:2x2
jax: 0.10.0
libtpu: 0.0.40
codegen_flags: <defaults>
</compile_context>

<pallas_src>
import jax
import jax.numpy as jnp
import numpy as np
from jax.experimental import pallas as pl
from jax.experimental.pallas import tpu as pltpu

# ---------------------------------------------------------------- config ----
B = 2                 # batch of pill images
C_IN = 3              # image channels
H = W = 16            # image spatial size
CONV_CH = 32          # synthetic conv backbone channels
IMAGE_EMB = 64        # args.image_embedding
TEXT_EMB = 32         # args.text_embedding
PROJ_DIM = 32         # args.projection_dim
GRAPH_HID = 64        # SAGE hidden width
GRAPH_EMB = 256       # graph encoder output (fixed by BatchNorm1d(256))
N_SENT = 8            # number of sentences == number of graph nodes
SEQ_LEN = 12          # tokens per sentence
VOCAB = 100

HP = H + 2                     # padded height
LINE_W = (W + 2) * C_IN        # flattened padded row width        = 54
K_CAT = 3 * LINE_W             # dh-stacked row width              = 162
CONV_LANES = W * CONV_CH       # conv output packed as (h, w*Cout) = 512

# packed projection output: image rows [0, B), sentence rows [8, 8+N_SENT)
SENT_ROW_OFF = 8
PROJ_OUT_ROWS = SENT_ROW_OFF + N_SENT   # 16


def _round8(n):
    return -(-n // 8) * 8


# ---------------------------------------------------- packed weight slabs ---
# All small parameters live in two f32 slabs read in-kernel via static,
# 8-row-aligned slices.  (name -> (row_offset, rows, lanes))
SLAB_S_LANES = 64     # "small" slab: everything <= 64 lanes wide
SLAB_L_LANES = 512    # "large" slab: conv bias tile + fused SAGE-2 weights

_S_ENTRIES = [
    ("pool",    (B, B * H)),              # per-image mean-over-h pooling matrix
    ("head_b",  (1, IMAGE_EMB)),
    ("ip_wp",   (IMAGE_EMB, PROJ_DIM)),   # image ProjectionHead
    ("ip_bp",   (1, PROJ_DIM)),
    ("ip_wf",   (PROJ_DIM, PROJ_DIM)),
    ("ip_bf",   (1, PROJ_DIM)),
    ("ip_g",    (1, PROJ_DIM)),
    ("ip_be",   (1, PROJ_DIM)),
    ("sent_w",  (TEXT_EMB, TEXT_EMB)),    # sentence pooler linear
    ("sent_b",  (1, TEXT_EMB)),
    ("sp_wp",   (TEXT_EMB, PROJ_DIM)),    # sentence ProjectionHead
    ("sp_bp",   (1, PROJ_DIM)),
    ("sp_wf",   (PROJ_DIM, PROJ_DIM)),
    ("sp_bf",   (1, PROJ_DIM)),
    ("sp_g",    (1, PROJ_DIM)),
    ("sp_be",   (1, PROJ_DIM)),
    ("sage1_w", (2 * TEXT_EMB, GRAPH_HID)),   # [self; neighbor] fused
    ("sage1_b", (1, GRAPH_HID)),
    ("post_w",  (GRAPH_EMB, 2)),              # BN(eval) scale folded in
    ("post_b",  (1, 2)),
]
_L_ENTRIES = [
    ("cbias",   (1, CONV_LANES)),             # conv bias tiled over w
    ("sage2_w", (2 * GRAPH_HID, GRAPH_EMB)),  # [self; neighbor] fused
    ("sage2_b", (1, GRAPH_EMB)),
]


def _build_layout(entries):
    layout, off = {}, 0
    for name, (r, c) in entries:
        layout[name] = (off, r, c)
        off += _round8(r)                 # every entry starts on an 8-row tile
    return layout, _round8(off)


S_LAYOUT, S_ROWS = _build_layout(_S_ENTRIES)
L_LAYOUT, L_ROWS = _build_layout(_L_ENTRIES)


def _pack_slab(layout, rows, lanes, tensors):
    slab = np.zeros((rows, lanes), np.float32)
    for name, arr in tensors.items():
        off, r, c = layout[name]
        slab[off:off + r, 0:c] = np.asarray(arr, np.float32).reshape(r, c)
    return jnp.asarray(slab)


# ----------------------------------------------------------- fused kernel ---
def _gelu(x):
    # tanh-approx GELU (see TODO(synk) above).  Stays f32 (v5e VPU/EUP).
    return jax.nn.gelu(x, approximate=True)


def _proj_head(x, wp, bp, wf, bf, gamma, beta):
    """CLIP-style ProjectionHead: proj -> gelu -> fc -> (+residual) -> LayerNorm."""
    projected = jnp.dot(x, wp, preferred_element_type=jnp.float32) + bp
    h = _gelu(projected)
    h = jnp.dot(h, wf, preferred_element_type=jnp.float32) + bf
    h = h + projected                        # dropout = identity (eval mode)
    mean = jnp.mean(h, axis=-1, keepdims=True)
    var = jnp.mean((h - mean) ** 2, axis=-1, keepdims=True)
    return (h - mean) * jax.lax.rsqrt(var + 1e-5) * gamma + beta


def fused_forward_kernel(
    x_ref,       # (B*H, K_CAT)        bf16  dh-stacked padded image rows
    emb_ref,     # (N, L, E)           f32   mask-weighted token embeddings
    a_ref,       # (N, N)              f32   row-normalized adjacency
    wcat_ref,    # (K_CAT, CONV_LANES) bf16  merged banded conv weights
    headw_ref,   # (CONV_LANES, IMAGE_EMB) bf16  image head (mean-over-w folded)
    s_ref,       # (S_ROWS, 64)        f32   small-parameter slab
    l_ref,       # (L_ROWS, 512)       f32   large-parameter slab
    proj_out_ref,   # (16, PROJ_DIM): image rows [0,B), sentence rows [8,16)
    graph_out_ref,  # (N, 2)
):
    def s(name):
        off, r, c = S_LAYOUT[name]
        return s_ref[off:off + r, 0:c]

    def l(name):
        off, r, c = L_LAYOUT[name]
        return l_ref[off:off + r, 0:c]

    # ---- image branch: ONE banded-conv matmul -> relu -> pooled head -> proj
    conv = jnp.dot(x_ref[...], wcat_ref[...],
                   preferred_element_type=jnp.float32)            # (B*H, 512)
    conv = jnp.maximum(conv + l("cbias"), 0.0)                    # bias + relu
    hmean = jnp.dot(s("pool"), conv,
                    preferred_element_type=jnp.float32)           # (B, 512) mean over h
    img_feat = jnp.dot(hmean.astype(jnp.bfloat16), headw_ref[...],
                       preferred_element_type=jnp.float32) + s("head_b")   # (B, 64)
    img_proj = _proj_head(img_feat, s("ip_wp"), s("ip_bp"), s("ip_wf"),
                          s("ip_bf"), s("ip_g"), s("ip_be"))      # (B, PROJ)

    # ---- sentence branch: mask-weighted embeddings already normalized --------
    pooled = jnp.sum(emb_ref[...], axis=1)                        # (N, E)
    sent_feat = jnp.tanh(
        jnp.dot(pooled, s("sent_w"), preferred_element_type=jnp.float32)
        + s("sent_b"))
    sent_proj = _proj_head(sent_feat, s("sp_wp"), s("sp_bp"), s("sp_wf"),
                           s("sp_bf"), s("sp_g"), s("sp_be"))     # (N, PROJ)

    # packed projection output (single DMA); unwritten pad rows zeroed.
    proj_out_ref[...] = jnp.zeros((PROJ_OUT_ROWS, PROJ_DIM), jnp.float32)
    proj_out_ref[0:B, :] = img_proj
    proj_out_ref[SENT_ROW_OFF:SENT_ROW_OFF + N_SENT, :] = sent_proj

    # ---- graph branch: 2 fused SAGE layers -> BN(folded) -> Linear -> GELU ---
    a = a_ref[...]
    neigh1 = jnp.dot(a, sent_feat, preferred_element_type=jnp.float32)
    h1 = jnp.maximum(
        jnp.dot(jnp.concatenate([sent_feat, neigh1], axis=-1), s("sage1_w"),
                preferred_element_type=jnp.float32) + s("sage1_b"), 0.0)
    neigh2 = jnp.dot(a, h1, preferred_element_type=jnp.float32)
    gfeat = (jnp.dot(jnp.concatenate([h1, neigh2], axis=-1), l("sage2_w"),
                     preferred_element_type=jnp.float32) + l("sage2_b"))
    # eval BatchNorm1d(256, affine=False) with mean=0/var=1 is folded into post_w.
    # dropout = identity (eval mode)
    logits = _gelu(
        jnp.dot(gfeat, s("post_w"), preferred_element_type=jnp.float32)
        + s("post_b"))
    m = jnp.max(logits, axis=-1, keepdims=True)
    lse = jnp.log(jnp.sum(jnp.exp(logits - m), axis=-1, keepdims=True)) + m
    graph_out_ref[...] = logits - lse


# --------------------------------------------------------------- wrapper ----
def prescription_pill_forward(params, pills_images, text_ids, text_mask, a_norm):
    # Image layout prep: NCHW->NHWC, SAME pad, flatten rows, stack the 3
    # dh-shifted row windows along lanes.  The conv then becomes a single
    # (B*H, 162)x(162, 512) matmul and every per-image slice (rows b*16..)
    # starts on an 8-aligned sublane boundary.
    x = jnp.transpose(pills_images, (0, 2, 3, 1))                 # (B, H, W, C)
    xp = jnp.pad(x, ((0, 0), (1, 1), (1, 1), (0, 0)))             # (B, 18, 18, C)
    xr = xp.reshape(B, HP, LINE_W)                                # (B, 18, 54)
    x_cat = jnp.concatenate([xr[:, 0:H], xr[:, 1:H + 1], xr[:, 2:H + 2]],
                            axis=-1)                              # (B, 16, 162)
    x2d = x_cat.reshape(B * H, K_CAT).astype(jnp.bfloat16)        # (32, 162)

    # Sentence prep: single gather; mask normalized by token count and
    # pre-applied, so the kernel's pooling is a plain sum.
    emb = jnp.take(params["tok_emb"], text_ids, axis=0)           # (N, L, E)
    mask_norm = text_mask / jnp.maximum(
        jnp.sum(text_mask, axis=1, keepdims=True), 1e-9)          # (N, L)
    emb_w = (emb * mask_norm[:, :, None]).astype(jnp.float32)     # (N, L, E)

    args = (x2d, emb_w, a_norm,
            params["wcat"], params["headw"], params["slab_s"], params["slab_l"])
    out_shape = (
        jax.ShapeDtypeStruct((PROJ_OUT_ROWS, PROJ_DIM), jnp.float32),
        jax.ShapeDtypeStruct((N_SENT, 2), jnp.float32),
    )
    proj_packed, graph_extract = pl.pallas_call(
        fused_forward_kernel,
        out_shape=out_shape,
        in_specs=[pl.BlockSpec(memory_space=pltpu.MemorySpace.VMEM)] * len(args),
        out_specs=tuple(pl.BlockSpec(memory_space=pltpu.MemorySpace.VMEM)
                        for _ in out_shape),
    )(*args)

    image_agg = proj_packed[0:B]
    sent_proj = proj_packed[SENT_ROW_OFF:SENT_ROW_OFF + N_SENT]
    return image_agg, sent_proj, graph_extract


# ------------------------------------------------------------------ init ----
def build_banded_conv(conv_w):
    """Fold the 3x3xC->Cout kernel into one merged banded (3*LINE_W, W*Cout) matrix.

    wcat[dh*LINE_W + (w+dw)*C + c, w*Cout + co] = K[dh, dw, c, co], so that for
    dh-stacked padded rows X (rows = output h, cols = (dh, w, c) flattened):
        conv[h, w, co] = (X[h, :] @ wcat)[w*Cout + co]
    i.e. the whole im2col lives in this one precomputed weight matrix.
    """
    k = np.asarray(conv_w).reshape(3, 3, C_IN, CONV_CH)            # [dh, dw, c, co]
    wb = np.zeros((3, LINE_W, CONV_LANES), np.float32)
    for dh in range(3):
        for dw in range(3):
            for w in range(W):
                wb[dh,
                   (w + dw) * C_IN:(w + dw + 1) * C_IN,
                   w * CONV_CH:(w + 1) * CONV_CH] = k[dh, dw]
    return wb.reshape(K_CAT, CONV_LANES)


def init_params(key):
    ks = iter(jax.random.split(key, 24))

    def wgt(shape, scale=0.1):
        return scale * jax.random.normal(next(ks), shape, dtype=jnp.float32)

    def proj_head_params(e, p):
        return dict(wp=wgt((e, p)), bp=jnp.zeros((1, p), jnp.float32),
                    wf=wgt((p, p)), bf=jnp.zeros((1, p), jnp.float32),
                    gamma=jnp.ones((1, p), jnp.float32),
                    beta=jnp.zeros((1, p), jnp.float32))

    # canonical synthetic-backbone weights
    conv_w = wgt((9 * C_IN, CONV_CH))
    conv_b = jnp.zeros((1, CONV_CH), jnp.float32)
    img_head_w = wgt((CONV_CH, IMAGE_EMB))
    ip = proj_head_params(IMAGE_EMB, PROJ_DIM)
    sp = proj_head_params(TEXT_EMB, PROJ_DIM)
    sage1_ws, sage1_wn = wgt((TEXT_EMB, GRAPH_HID)), wgt((TEXT_EMB, GRAPH_HID))
    sage2_ws, sage2_wn = wgt((GRAPH_HID, GRAPH_EMB)), wgt((GRAPH_HID, GRAPH_EMB))
    post_w = wgt((GRAPH_EMB, 2))
    sent_w = wgt((TEXT_EMB, TEXT_EMB))
    tok_emb = wgt((VOCAB, TEXT_EMB))
    # graph_projection exists in the PyTorch module but is unused in forward().

    params = dict(tok_emb=tok_emb)

    # Derived / packed weights, precomputed ONCE at init:
    #  * merged banded conv (in-kernel im2col), stored bf16 for the MXU,
    #  * image head with mean-over-w of the GAP folded in, stored bf16,
    #  * per-image mean-over-h pooling matrix,
    #  * BN(eval) scale folded into post-process Linear weight,
    #  * everything small packed into two f32 slabs with 8-aligned row offsets.
    params["wcat"] = jnp.asarray(build_banded_conv(conv_w), jnp.bfloat16)
    params["headw"] = (jnp.tile(img_head_w, (W, 1)) / float(W)).astype(jnp.bfloat16)

    pool = np.zeros((B, B * H), np.float32)
    for b in range(B):
        pool[b, b * H:(b + 1) * H] = 1.0 / H

    bn_scale = 1.0 / np.sqrt(1.0 + 1e-5)   # BatchNorm1d(256) eval, mean=0/var=1

    s_tensors = dict(
        pool=pool,
        head_b=jnp.zeros((1, IMAGE_EMB), jnp.float32),
        ip_wp=ip["wp"], ip_bp=ip["bp"], ip_wf=ip["wf"], ip_bf=ip["bf"],
        ip_g=ip["gamma"], ip_be=ip["beta"],
        sent_w=sent_w, sent_b=jnp.zeros((1, TEXT_EMB), jnp.float32),
        sp_wp=sp["wp"], sp_bp=sp["bp"], sp_wf=sp["wf"], sp_bf=sp["bf"],
        sp_g=sp["gamma"], sp_be=sp["beta"],
        sage1_w=jnp.concatenate([sage1_ws, sage1_wn], axis=0),
        sage1_b=jnp.zeros((1, GRAPH_HID), jnp.float32),
        post_w=post_w * bn_scale,
        post_b=jnp.zeros((1, 2), jnp.float32),
    )
    l_tensors = dict(
        cbias=jnp.tile(conv_b, (1, W)),
        sage2_w=jnp.concatenate([sage2_ws, sage2_wn], axis=0),
        sage2_b=jnp.zeros((1, GRAPH_EMB), jnp.float32),
    )
    params["slab_s"] = _pack_slab(S_LAYOUT, S_ROWS, SLAB_S_LANES, s_tensors)
    params["slab_l"] = _pack_slab(L_LAYOUT, L_ROWS, SLAB_L_LANES, l_tensors)
    return params


def edge_index_to_norm_adj(edge_index, num_nodes):
    """Dense row-normalized adjacency (mean aggregation over incoming edges).

    Computed once outside the jitted forward (static for a fixed edge_index).
    """
    src, dst = edge_index[0], edge_index[1]
    adj = jnp.zeros((num_nodes, num_nodes), jnp.float32).at[dst, src].set(1.0)
    deg = jnp.maximum(jnp.sum(adj, axis=1, keepdims=True), 1.0)
    return adj / deg


# ------------------------------------------------------------------ main ----
if __name__ == "__main__":
    key = jax.random.PRNGKey(0)
    params = init_params(key)
    k_img, k_ids = jax.random.split(jax.random.fold_in(key, 1))

    pills_images = jax.random.normal(k_img, (B, C_IN, H, W), jnp.float32)   # NCHW
    text_ids = jax.random.randint(k_ids, (N_SENT, SEQ_LEN), 0, VOCAB, jnp.int32)
    lengths = jnp.array([12, 10, 8, 12, 6, 9, 12, 4], jnp.int32)
    text_mask = (jnp.arange(SEQ_LEN)[None, :] < lengths[:, None]).astype(jnp.float32)

    # bidirectional ring graph over the 8 sentence nodes
    src = jnp.array([0, 1, 2, 3, 4, 5, 6, 7, 1, 2, 3, 4, 5, 6, 7, 0], jnp.int32)
    dst = jnp.array([1, 2, 3, 4, 5, 6, 7, 0, 0, 1, 2, 3, 4, 5, 6, 7], jnp.int32)
    edge_index = jnp.stack([src, dst])

    # adjacency normalization hoisted out of the jitted forward (computed once)
    a_norm = jax.block_until_ready(edge_index_to_norm_adj(edge_index, N_SENT))

    fwd = jax.jit(prescription_pill_forward)
    image_agg, sent_proj, graph_extract = fwd(
        params, pills_images, text_ids, text_mask, a_norm
    )
    jax.block_until_ready((image_agg, sent_proj, graph_extract))

    assert image_agg.shape == (B, PROJ_DIM)
    assert sent_proj.shape == (N_SENT, PROJ_DIM)
    assert graph_extract.shape == (N_SENT, 2)
    print("KERNEL_OK")
</pallas_src>

<mosaic_0001>
module attributes {stable_mosaic.version = 11 : i64} {
  func.func @fused_forward_kernel(%arg0: memref<32x162xbf16, #tpu.memory_space<vmem>>, %arg1: memref<8x12x32xf32, #tpu.memory_space<vmem>>, %arg2: memref<8x8xf32, #tpu.memory_space<vmem>>, %arg3: memref<162x512xbf16, #tpu.memory_space<vmem>>, %arg4: memref<512x64xbf16, #tpu.memory_space<vmem>>, %arg5: memref<616x64xf32, #tpu.memory_space<vmem>>, %arg6: memref<144x512xf32, #tpu.memory_space<vmem>>, %arg7: memref<16x32xf32, #tpu.memory_space<vmem>>, %arg8: memref<8x2xf32, #tpu.memory_space<vmem>>) attributes {dimension_semantics = [], scalar_prefetch = 0 : i64, scratch_operands = 0 : i64, tpu.core_type = #tpu.core_type<tc>} {
    %c0 = arith.constant 0 : index
    %c0_0 = arith.constant 0 : index
    %0 = vector.load %arg0[%c0, %c0_0] : memref<32x162xbf16, #tpu.memory_space<vmem>>, vector<32x162xbf16>
    %c0_1 = arith.constant 0 : index
    %c0_2 = arith.constant 0 : index
    %1 = vector.load %arg3[%c0_1, %c0_2] : memref<162x512xbf16, #tpu.memory_space<vmem>>, vector<162x512xbf16>
    %cst = arith.constant dense<0.000000e+00> : vector<32x512xf32>
    %2 = tpu.matmul %0, %1, %cst {dimension_numbers = #tpu.dot_dimension_numbers<[1], [0], [0], [1], [0, 0, 1, 1], [], []>} : vector<32x162xbf16>, vector<162x512xbf16>, vector<32x512xf32> -> vector<32x512xf32>
    %c0_3 = arith.constant 0 : index
    %c0_4 = arith.constant 0 : index
    %3 = vector.load %arg6[%c0_3, %c0_4] : memref<144x512xf32, #tpu.memory_space<vmem>>, vector<1x512xf32>
    %4 = vector.broadcast %3 : vector<1x512xf32> to vector<32x512xf32>
    %5 = arith.addf %2, %4 : vector<32x512xf32>
    %cst_5 = arith.constant 0.000000e+00 : f32
    %6 = vector.broadcast %cst_5 : f32 to vector<32x512xf32>
    %7 = arith.maximumf %5, %6 : vector<32x512xf32>
    %c0_6 = arith.constant 0 : index
    %c0_7 = arith.constant 0 : index
    %8 = vector.load %arg5[%c0_6, %c0_7] : memref<616x64xf32, #tpu.memory_space<vmem>>, vector<2x32xf32>
    %cst_8 = arith.constant dense<0.000000e+00> : vector<2x512xf32>
    %9 = tpu.matmul %8, %7, %cst_8 {dimension_numbers = #tpu.dot_dimension_numbers<[1], [0], [0], [1], [0, 0, 1, 1], [], []>} : vector<2x32xf32>, vector<32x512xf32>, vector<2x512xf32> -> vector<2x512xf32>
    %10 = arith.truncf %9 : vector<2x512xf32> to vector<2x512xbf16>
    %c0_9 = arith.constant 0 : index
    %c0_10 = arith.constant 0 : index
    %11 = vector.load %arg4[%c0_9, %c0_10] : memref<512x64xbf16, #tpu.memory_space<vmem>>, vector<512x64xbf16>
    %cst_11 = arith.constant dense<0.000000e+00> : vector<2x64xf32>
    %12 = tpu.matmul %10, %11, %cst_11 {dimension_numbers = #tpu.dot_dimension_numbers<[1], [0], [0], [1], [0, 0, 1, 1], [], []>} : vector<2x512xbf16>, vector<512x64xbf16>, vector<2x64xf32> -> vector<2x64xf32>
    %c8 = arith.constant 8 : index
    %c0_12 = arith.constant 0 : index
    %13 = vector.load %arg5[%c8, %c0_12] : memref<616x64xf32, #tpu.memory_space<vmem>>, vector<1x64xf32>
    %14 = vector.broadcast %13 : vector<1x64xf32> to vector<2x64xf32>
    %15 = arith.addf %12, %14 : vector<2x64xf32>
    %c16 = arith.constant 16 : index
    %c0_13 = arith.constant 0 : index
    %16 = vector.load %arg5[%c16, %c0_13] : memref<616x64xf32, #tpu.memory_space<vmem>>, vector<64x32xf32>
    %c80 = arith.constant 80 : index
    %c0_14 = arith.constant 0 : index
    %17 = vector.load %arg5[%c80, %c0_14] : memref<616x64xf32, #tpu.memory_space<vmem>>, vector<1x32xf32>
    %c88 = arith.constant 88 : index
    %c0_15 = arith.constant 0 : index
    %18 = vector.load %arg5[%c88, %c0_15] : memref<616x64xf32, #tpu.memory_space<vmem>>, vector<32x32xf32>
    %c120 = arith.constant 120 : index
    %c0_16 = arith.constant 0 : index
    %19 = vector.load %arg5[%c120, %c0_16] : memref<616x64xf32, #tpu.memory_space<vmem>>, vector<1x32xf32>
    %c128 = arith.constant 128 : index
    %c0_17 = arith.constant 0 : index
    %20 = vector.load %arg5[%c128, %c0_17] : memref<616x64xf32, #tpu.memory_space<vmem>>, vector<1x32xf32>
    %c136 = arith.constant 136 : index
    %c0_18 = arith.constant 0 : index
    %21 = vector.load %arg5[%c136, %c0_18] : memref<616x64xf32, #tpu.memory_space<vmem>>, vector<1x32xf32>
    %cst_19 = arith.constant dense<0.000000e+00> : vector<2x32xf32>
    %22 = tpu.matmul %15, %16, %cst_19 {dimension_numbers = #tpu.dot_dimension_numbers<[1], [0], [0], [1], [0, 0, 1, 1], [], []>} : vector<2x64xf32>, vector<64x32xf32>, vector<2x32xf32> -> vector<2x32xf32>
    %23 = vector.broadcast %17 : vector<1x32xf32> to vector<2x32xf32>
    %24 = arith.addf %22, %23 : vector<2x32xf32>
    %25 = arith.mulf %24, %24 : vector<2x32xf32>
    %26 = arith.mulf %24, %25 : vector<2x32xf32>
    %cst_20 = arith.constant 4.471500e-02 : f32
    %27 = vector.broadcast %cst_20 : f32 to vector<2x32xf32>
    %28 = arith.mulf %27, %26 : vector<2x32xf32>
    %29 = arith.addf %24, %28 : vector<2x32xf32>
    %cst_21 = arith.constant 0.797884583 : f32
    %30 = vector.broadcast %cst_21 : f32 to vector<2x32xf32>
    %31 = arith.mulf %30, %29 : vector<2x32xf32>
    %32 = math.tanh %31 : vector<2x32xf32>
    %cst_22 = arith.constant 1.000000e+00 : f32
    %33 = vector.broadcast %cst_22 : f32 to vector<2x32xf32>
    %34 = arith.addf %33, %32 : vector<2x32xf32>
    %cst_23 = arith.constant 5.000000e-01 : f32
    %35 = vector.broadcast %cst_23 : f32 to vector<2x32xf32>
    %36 = arith.mulf %35, %34 : vector<2x32xf32>
    %37 = arith.mulf %24, %36 : vector<2x32xf32>
    %cst_24 = arith.constant dense<0.000000e+00> : vector<2x32xf32>
    %38 = tpu.matmul %37, %18, %cst_24 {dimension_numbers = #tpu.dot_dimension_numbers<[1], [0], [0], [1], [0, 0, 1, 1], [], []>} : vector<2x32xf32>, vector<32x32xf32>, vector<2x32xf32> -> vector<2x32xf32>
    %39 = vector.broadcast %19 : vector<1x32xf32> to vector<2x32xf32>
    %40 = arith.addf %38, %39 : vector<2x32xf32>
    %41 = arith.addf %40, %24 : vector<2x32xf32>
    %cst_25 = arith.constant dense<0.000000e+00> : vector<2xf32>
    %42 = vector.multi_reduction <add>, %41, %cst_25 [1] : vector<2x32xf32> to vector<2xf32>
    %43 = vector.shape_cast %42 : vector<2xf32> to vector<2x1xf32>
    %cst_26 = arith.constant 3.200000e+01 : f32
    %44 = vector.broadcast %cst_26 : f32 to vector<2x1xf32>
    %45 = arith.divf %43, %44 : vector<2x1xf32>
    %46 = vector.broadcast %45 : vector<2x1xf32> to vector<2x32xf32>
    %47 = arith.subf %41, %46 : vector<2x32xf32>
    %48 = arith.mulf %47, %47 : vector<2x32xf32>
    %cst_27 = arith.constant dense<0.000000e+00> : vector<2xf32>
    %49 = vector.multi_reduction <add>, %48, %cst_27 [1] : vector<2x32xf32> to vector<2xf32>
    %50 = vector.shape_cast %49 : vector<2xf32> to vector<2x1xf32>
    %cst_28 = arith.constant 3.200000e+01 : f32
    %51 = vector.broadcast %cst_28 : f32 to vector<2x1xf32>
    %52 = arith.divf %50, %51 : vector<2x1xf32>
    %53 = vector.broadcast %45 : vector<2x1xf32> to vector<2x32xf32>
    %54 = arith.subf %41, %53 : vector<2x32xf32>
    %cst_29 = arith.constant 9.99999974E-6 : f32
    %55 = vector.broadcast %cst_29 : f32 to vector<2x1xf32>
    %56 = arith.addf %52, %55 : vector<2x1xf32>
    %57 = math.rsqrt %56 : vector<2x1xf32>
    %58 = vector.broadcast %57 : vector<2x1xf32> to vector<2x32xf32>
    %59 = arith.mulf %54, %58 : vector<2x32xf32>
    %60 = vector.broadcast %20 : vector<1x32xf32> to vector<2x32xf32>
    %61 = arith.mulf %59, %60 : vector<2x32xf32>
    %62 = vector.broadcast %21 : vector<1x32xf32> to vector<2x32xf32>
    %63 = arith.addf %61, %62 : vector<2x32xf32>
    %c0_30 = arith.constant 0 : index
    %c0_31 = arith.constant 0 : index
    %c0_32 = arith.constant 0 : index
    %64 = vector.load %arg1[%c0_30, %c0_31, %c0_32] : memref<8x12x32xf32, #tpu.memory_space<vmem>>, vector<8x12x32xf32>
    %cst_33 = arith.constant dense<0.000000e+00> : vector<8x32xf32>
    %65 = vector.multi_reduction <add>, %64, %cst_33 [1] : vector<8x12x32xf32> to vector<8x32xf32>
    %c144 = arith.constant 144 : index
    %c0_34 = arith.constant 0 : index
    %66 = vector.load %arg5[%c144, %c0_34] : memref<616x64xf32, #tpu.memory_space<vmem>>, vector<32x32xf32>
    %cst_35 = arith.constant dense<0.000000e+00> : vector<8x32xf32>
    %67 = tpu.matmul %65, %66, %cst_35 {dimension_numbers = #tpu.dot_dimension_numbers<[1], [0], [0], [1], [0, 0, 1, 1], [], []>} : vector<8x32xf32>, vector<32x32xf32>, vector<8x32xf32> -> vector<8x32xf32>
    %c176 = arith.constant 176 : index
    %c0_36 = arith.constant 0 : index
    %68 = vector.load %arg5[%c176, %c0_36] : memref<616x64xf32, #tpu.memory_space<vmem>>, vector<1x32xf32>
    %69 = vector.broadcast %68 : vector<1x32xf32> to vector<8x32xf32>
    %70 = arith.addf %67, %69 : vector<8x32xf32>
    %71 = math.tanh %70 : vector<8x32xf32>
    %c184 = arith.constant 184 : index
    %c0_37 = arith.constant 0 : index
    %72 = vector.load %arg5[%c184, %c0_37] : memref<616x64xf32, #tpu.memory_space<vmem>>, vector<32x32xf32>
    %c216 = arith.constant 216 : index
    %c0_38 = arith.constant 0 : index
    %73 = vector.load %arg5[%c216, %c0_38] : memref<616x64xf32, #tpu.memory_space<vmem>>, vector<1x32xf32>
    %c224 = arith.constant 224 : index
    %c0_39 = arith.constant 0 : index
    %74 = vector.load %arg5[%c224, %c0_39] : memref<616x64xf32, #tpu.memory_space<vmem>>, vector<32x32xf32>
    %c256 = arith.constant 256 : index
    %c0_40 = arith.constant 0 : index
    %75 = vector.load %arg5[%c256, %c0_40] : memref<616x64xf32, #tpu.memory_space<vmem>>, vector<1x32xf32>
    %c264 = arith.constant 264 : index
    %c0_41 = arith.constant 0 : index
    %76 = vector.load %arg5[%c264, %c0_41] : memref<616x64xf32, #tpu.memory_space<vmem>>, vector<1x32xf32>
    %c272 = arith.constant 272 : index
    %c0_42 = arith.constant 0 : index
    %77 = vector.load %arg5[%c272, %c0_42] : memref<616x64xf32, #tpu.memory_space<vmem>>, vector<1x32xf32>
    %cst_43 = arith.constant dense<0.000000e+00> : vector<8x32xf32>
    %78 = tpu.matmul %71, %72, %cst_43 {dimension_numbers = #tpu.dot_dimension_numbers<[1], [0], [0], [1], [0, 0, 1, 1], [], []>} : vector<8x32xf32>, vector<32x32xf32>, vector<8x32xf32> -> vector<8x32xf32>
    %79 = vector.broadcast %73 : vector<1x32xf32> to vector<8x32xf32>
    %80 = arith.addf %78, %79 : vector<8x32xf32>
    %81 = arith.mulf %80, %80 : vector<8x32xf32>
    %82 = arith.mulf %80, %81 : vector<8x32xf32>
    %cst_44 = arith.constant 4.471500e-02 : f32
    %83 = vector.broadcast %cst_44 : f32 to vector<8x32xf32>
    %84 = arith.mulf %83, %82 : vector<8x32xf32>
    %85 = arith.addf %80, %84 : vector<8x32xf32>
    %cst_45 = arith.constant 0.797884583 : f32
    %86 = vector.broadcast %cst_45 : f32 to vector<8x32xf32>
    %87 = arith.mulf %86, %85 : vector<8x32xf32>
    %88 = math.tanh %87 : vector<8x32xf32>
    %cst_46 = arith.constant 1.000000e+00 : f32
    %89 = vector.broadcast %cst_46 : f32 to vector<8x32xf32>
    %90 = arith.addf %89, %88 : vector<8x32xf32>
    %cst_47 = arith.constant 5.000000e-01 : f32
    %91 = vector.broadcast %cst_47 : f32 to vector<8x32xf32>
    %92 = arith.mulf %91, %90 : vector<8x32xf32>
    %93 = arith.mulf %80, %92 : vector<8x32xf32>
    %cst_48 = arith.constant dense<0.000000e+00> : vector<8x32xf32>
    %94 = tpu.matmul %93, %74, %cst_48 {dimension_numbers = #tpu.dot_dimension_numbers<[1], [0], [0], [1], [0, 0, 1, 1], [], []>} : vector<8x32xf32>, vector<32x32xf32>, vector<8x32xf32> -> vector<8x32xf32>
    %95 = vector.broadcast %75 : vector<1x32xf32> to vector<8x32xf32>
    %96 = arith.addf %94, %95 : vector<8x32xf32>
    %97 = arith.addf %96, %80 : vector<8x32xf32>
    %cst_49 = arith.constant dense<0.000000e+00> : vector<8xf32>
    %98 = vector.multi_reduction <add>, %97, %cst_49 [1] : vector<8x32xf32> to vector<8xf32>
    %99 = vector.shape_cast %98 : vector<8xf32> to vector<8x1xf32>
    %cst_50 = arith.constant 3.200000e+01 : f32
    %100 = vector.broadcast %cst_50 : f32 to vector<8x1xf32>
    %101 = arith.divf %99, %100 : vector<8x1xf32>
    %102 = vector.broadcast %101 : vector<8x1xf32> to vector<8x32xf32>
    %103 = arith.subf %97, %102 : vector<8x32xf32>
    %104 = arith.mulf %103, %103 : vector<8x32xf32>
    %cst_51 = arith.constant dense<0.000000e+00> : vector<8xf32>
    %105 = vector.multi_reduction <add>, %104, %cst_51 [1] : vector<8x32xf32> to vector<8xf32>
    %106 = vector.shape_cast %105 : vector<8xf32> to vector<8x1xf32>
    %cst_52 = arith.constant 3.200000e+01 : f32
    %107 = vector.broadcast %cst_52 : f32 to vector<8x1xf32>
    %108 = arith.divf %106, %107 : vector<8x1xf32>
    %109 = vector.broadcast %101 : vector<8x1xf32> to vector<8x32xf32>
    %110 = arith.subf %97, %109 : vector<8x32xf32>
    %cst_53 = arith.constant 9.99999974E-6 : f32
    %111 = vector.broadcast %cst_53 : f32 to vector<8x1xf32>
    %112 = arith.addf %108, %111 : vector<8x1xf32>
    %113 = math.rsqrt %112 : vector<8x1xf32>
    %114 = vector.broadcast %113 : vector<8x1xf32> to vector<8x32xf32>
    %115 = arith.mulf %110, %114 : vector<8x32xf32>
    %116 = vector.broadcast %76 : vector<1x32xf32> to vector<8x32xf32>
    %117 = arith.mulf %115, %116 : vector<8x32xf32>
    %118 = vector.broadcast %77 : vector<1x32xf32> to vector<8x32xf32>
    %119 = arith.addf %117, %118 : vector<8x32xf32>
    %cst_54 = arith.constant 0.000000e+00 : f32
    %120 = vector.broadcast %cst_54 : f32 to vector<16x32xf32>
    %c0_55 = arith.constant 0 : index
    %c0_56 = arith.constant 0 : index
    %121 = vector.load %arg7[%c0_55, %c0_56] : memref<16x32xf32, #tpu.memory_space<vmem>>, vector<16x32xf32>
    tpu.vector_store %arg7[%c0_55, %c0_56], %120 {strides = array<i32>} : memref<16x32xf32, #tpu.memory_space<vmem>>, vector<16x32xf32>,
    %c0_57 = arith.constant 0 : index
    %c0_58 = arith.constant 0 : index
    %122 = vector.load %arg7[%c0_57, %c0_58] : memref<16x32xf32, #tpu.memory_space<vmem>>, vector<2x32xf32>
    tpu.vector_store %arg7[%c0_57, %c0_58], %63 {strides = array<i32>} : memref<16x32xf32, #tpu.memory_space<vmem>>, vector<2x32xf32>,
    %c8_59 = arith.constant 8 : index
    %c0_60 = arith.constant 0 : index
    %123 = vector.load %arg7[%c8_59, %c0_60] : memref<16x32xf32, #tpu.memory_space<vmem>>, vector<8x32xf32>
    tpu.vector_store %arg7[%c8_59, %c0_60], %119 {strides = array<i32>} : memref<16x32xf32, #tpu.memory_space<vmem>>, vector<8x32xf32>,
    %c0_61 = arith.constant 0 : index
    %c0_62 = arith.constant 0 : index
    %124 = vector.load %arg2[%c0_61, %c0_62] : memref<8x8xf32, #tpu.memory_space<vmem>>, vector<8x8xf32>
    %cst_63 = arith.constant dense<0.000000e+00> : vector<8x32xf32>
    %125 = tpu.matmul %124, %71, %cst_63 {dimension_numbers = #tpu.dot_dimension_numbers<[1], [0], [0], [1], [0, 0, 1, 1], [], []>} : vector<8x8xf32>, vector<8x32xf32>, vector<8x32xf32> -> vector<8x32xf32>
    %126 = tpu.concatenate %71, %125 in 1 : vector<8x32xf32>, vector<8x32xf32> -> vector<8x64xf32>
    %c280 = arith.constant 280 : index
    %c0_64 = arith.constant 0 : index
    %127 = vector.load %arg5[%c280, %c0_64] : memref<616x64xf32, #tpu.memory_space<vmem>>, vector<64x64xf32>
    %cst_65 = arith.constant dense<0.000000e+00> : vector<8x64xf32>
    %128 = tpu.matmul %126, %127, %cst_65 {dimension_numbers = #tpu.dot_dimension_numbers<[1], [0], [0], [1], [0, 0, 1, 1], [], []>} : vector<8x64xf32>, vector<64x64xf32>, vector<8x64xf32> -> vector<8x64xf32>
    %c344 = arith.constant 344 : index
    %c0_66 = arith.constant 0 : index
    %129 = vector.load %arg5[%c344, %c0_66] : memref<616x64xf32, #tpu.memory_space<vmem>>, vector<1x64xf32>
    %130 = vector.broadcast %129 : vector<1x64xf32> to vector<8x64xf32>
    %131 = arith.addf %128, %130 : vector<8x64xf32>
    %cst_67 = arith.constant 0.000000e+00 : f32
    %132 = vector.broadcast %cst_67 : f32 to vector<8x64xf32>
    %133 = arith.maximumf %131, %132 : vector<8x64xf32>
    %cst_68 = arith.constant dense<0.000000e+00> : vector<8x64xf32>
    %134 = tpu.matmul %124, %133, %cst_68 {dimension_numbers = #tpu.dot_dimension_numbers<[1], [0], [0], [1], [0, 0, 1, 1], [], []>} : vector<8x8xf32>, vector<8x64xf32>, vector<8x64xf32> -> vector<8x64xf32>
    %135 = tpu.concatenate %133, %134 in 1 : vector<8x64xf32>, vector<8x64xf32> -> vector<8x128xf32>
    %c8_69 = arith.constant 8 : index
    %c0_70 = arith.constant 0 : index
    %136 = vector.load %arg6[%c8_69, %c0_70] : memref<144x512xf32, #tpu.memory_space<vmem>>, vector<128x256xf32>
    %cst_71 = arith.constant dense<0.000000e+00> : vector<8x256xf32>
    %137 = tpu.matmul %135, %136, %cst_71 {dimension_numbers = #tpu.dot_dimension_numbers<[1], [0], [0], [1], [0, 0, 1, 1], [], []>} : vector<8x128xf32>, vector<128x256xf32>, vector<8x256xf32> -> vector<8x256xf32>
    %c136_72 = arith.constant 136 : index
    %c0_73 = arith.constant 0 : index
    %138 = vector.load %arg6[%c136_72, %c0_73] : memref<144x512xf32, #tpu.memory_space<vmem>>, vector<1x256xf32>
    %139 = vector.broadcast %138 : vector<1x256xf32> to vector<8x256xf32>
    %140 = arith.addf %137, %139 : vector<8x256xf32>
    %c352 = arith.constant 352 : index
    %c0_74 = arith.constant 0 : index
    %141 = vector.load %arg5[%c352, %c0_74] : memref<616x64xf32, #tpu.memory_space<vmem>>, vector<256x2xf32>
    %cst_75 = arith.constant dense<0.000000e+00> : vector<8x2xf32>
    %142 = tpu.matmul %140, %141, %cst_75 {dimension_numbers = #tpu.dot_dimension_numbers<[1], [0], [0], [1], [0, 0, 1, 1], [], []>} : vector<8x256xf32>, vector<256x2xf32>, vector<8x2xf32> -> vector<8x2xf32>
    %c608 = arith.constant 608 : index
    %c0_76 = arith.constant 0 : index
    %143 = vector.load %arg5[%c608, %c0_76] : memref<616x64xf32, #tpu.memory_space<vmem>>, vector<1x2xf32>
    %144 = vector.broadcast %143 : vector<1x2xf32> to vector<8x2xf32>
    %145 = arith.addf %142, %144 : vector<8x2xf32>
    %146 = arith.mulf %145, %145 : vector<8x2xf32>
    %147 = arith.mulf %145, %146 : vector<8x2xf32>
    %cst_77 = arith.constant 4.471500e-02 : f32
    %148 = vector.broadcast %cst_77 : f32 to vector<8x2xf32>
    %149 = arith.mulf %148, %147 : vector<8x2xf32>
    %150 = arith.addf %145, %149 : vector<8x2xf32>
    %cst_78 = arith.constant 0.797884583 : f32
    %151 = vector.broadcast %cst_78 : f32 to vector<8x2xf32>
    %152 = arith.mulf %151, %150 : vector<8x2xf32>
    %153 = math.tanh %152 : vector<8x2xf32>
    %cst_79 = arith.constant 1.000000e+00 : f32
    %154 = vector.broadcast %cst_79 : f32 to vector<8x2xf32>
    %155 = arith.addf %154, %153 : vector<8x2xf32>
    %cst_80 = arith.constant 5.000000e-01 : f32
    %156 = vector.broadcast %cst_80 : f32 to vector<8x2xf32>
    %157 = arith.mulf %156, %155 : vector<8x2xf32>
    %158 = arith.mulf %145, %157 : vector<8x2xf32>
    %cst_81 = arith.constant dense<0xFF800000> : vector<8xf32>
    %159 = vector.multi_reduction <maximumf>, %158, %cst_81 [1] : vector<8x2xf32> to vector<8xf32>
    %160 = vector.shape_cast %159 : vector<8xf32> to vector<8x1xf32>
    %161 = vector.broadcast %160 : vector<8x1xf32> to vector<8x2xf32>
    %162 = arith.subf %158, %161 : vector<8x2xf32>
    %163 = math.exp %162 : vector<8x2xf32>
    %cst_82 = arith.constant dense<0.000000e+00> : vector<8xf32>
    %164 = vector.multi_reduction <add>, %163, %cst_82 [1] : vector<8x2xf32> to vector<8xf32>
    %165 = vector.shape_cast %164 : vector<8xf32> to vector<8x1xf32>
    %166 = math.log %165 : vector<8x1xf32>
    %167 = arith.addf %166, %160 : vector<8x1xf32>
    %168 = vector.broadcast %167 : vector<8x1xf32> to vector<8x2xf32>
    %169 = arith.subf %158, %168 : vector<8x2xf32>
    %c0_83 = arith.constant 0 : index
    %c0_84 = arith.constant 0 : index
    %170 = vector.load %arg8[%c0_83, %c0_84] : memref<8x2xf32, #tpu.memory_space<vmem>>, vector<8x2xf32>
    tpu.vector_store %arg8[%c0_83, %c0_84], %169 {strides = array<i32>} : memref<8x2xf32, #tpu.memory_space<vmem>>, vector<8x2xf32>,
    return
  }
}

</mosaic_0001>

<llo_original>
// kernel: prescription_pill_forward.1
$region0: #{prescription_pill_forward.1}
  #allocation0 [shape = 'u32[]', space=smem, size = 0x4, offset = 0x4, fixed_abs, tag = 'smem constant byte address 0x4 - core index']
  #allocation1 [shape = 'u32[72,128]{1,0:T(1,128)}', space=vmem, size = 0x9000, scoped, tag = 'internal scratch']
  %s0 = inlined_call_operand.vmem [shape: bf16[32,162], index: 0, kind: input, shape index: {}]
  %s1 = inlined_call_operand.vmem [shape: f32[8,12,32], index: 1, kind: input, shape index: {}]
  %s2 = inlined_call_operand.vmem [shape: f32[8,8], index: 2, kind: input, shape index: {}]
  %s3 = inlined_call_operand.vmem [shape: bf16[162,512], index: 3, kind: input, shape index: {}]
  %s4 = inlined_call_operand.vmem [shape: bf16[512,64], index: 4, kind: input, shape index: {}]
  %s5 = inlined_call_operand.vmem [shape: f32[616,64], index: 5, kind: input, shape index: {}]
  %s6 = inlined_call_operand.vmem [shape: f32[144,512], index: 6, kind: input, shape index: {}]
  %s7 = inlined_call_operand.vmem [shape: f32[16,32], index: 7, kind: output, shape index: {0}]
  %s8 = inlined_call_operand.vmem [shape: f32[8,2], index: 8, kind: output, shape index: {1}]
  %9 = xla_tuple %s7, %s8
  %s10 = sld [smem:[#allocation0]]
  $region46: #{prescription_pill_forward.1} parent=0
    _
  %s12 = ssub.s32 1, %s10
  %s13 = scalar_select 0, %s12, %s10
  // Predicated region
  $region2: #{prescription_pill_forward.1} parent=0 // pred_check
    _
  $region3: #{prescription_pill_forward.1} parent=0 // pred_check_branch
    %15 = sbr.rel (0) target = $region5
  $region4: #{prescription_pill_forward.1} parent=0 // pred_region
    _
  $region5: #{prescription_pill_forward.1} parent=0 // pred_fallthru
    _
  // Predicated region
  $region6: #{prescription_pill_forward.1} parent=0 // pred_check
    _
  $region7: #{prescription_pill_forward.1} parent=0 // pred_check_branch
    %17 = sbr.rel (0) target = $region9
  $region8: #{prescription_pill_forward.1} parent=0 // pred_region
    _
  $region9: #{prescription_pill_forward.1} parent=0 // pred_fallthru
    _
  // Predicated region
  $region10: #{prescription_pill_forward.1} parent=0 // pred_check
    _
  $region11: #{prescription_pill_forward.1} parent=0 // pred_check_branch
    %19 = sbr.rel (0) target = $region13
  $region12: #{prescription_pill_forward.1} parent=0 // pred_region
    _
  $region13: #{prescription_pill_forward.1} parent=0 // pred_fallthru
    _
  // Predicated region
  $region14: #{prescription_pill_forward.1} parent=0 // pred_check
    _
  $region15: #{prescription_pill_forward.1} parent=0 // pred_check_branch
    %21 = sbr.rel (0) target = $region17
  $region16: #{prescription_pill_forward.1} parent=0 // pred_region
    _
  $region17: #{prescription_pill_forward.1} parent=0 // pred_fallthru
    _
  // Predicated region
  $region18: #{prescription_pill_forward.1} parent=0 // pred_check
    _
  $region19: #{prescription_pill_forward.1} parent=0 // pred_check_branch
    %23 = sbr.rel (0) target = $region21
  $region20: #{prescription_pill_forward.1} parent=0 // pred_region
    _
  $region21: #{prescription_pill_forward.1} parent=0 // pred_fallthru
    _
  // Predicated region
  $region22: #{prescription_pill_forward.1} parent=0 // pred_check
    _
  $region23: #{prescription_pill_forward.1} parent=0 // pred_check_branch
    %25 = sbr.rel (0) target = $region25
  $region24: #{prescription_pill_forward.1} parent=0 // pred_region
    _
  $region25: #{prescription_pill_forward.1} parent=0 // pred_fallthru
    _
  // Predicated region
  $region26: #{prescription_pill_forward.1} parent=0 // pred_check
    _
  $region27: #{prescription_pill_forward.1} parent=0 // pred_check_branch
    %27 = sbr.rel (0) target = $region29
  $region28: #{prescription_pill_forward.1} parent=0 // pred_region
    _
  $region29: #{prescription_pill_forward.1} parent=0 // pred_fallthru
    _
  %v29 = vld [vmem:[%s0] sm:$0xff]
  %v30 = vld [vmem:[%s0 + $0x8] sm:$0xff]
  %v31 = vld [vmem:[%s0 + $0x10] sm:$0xff]
  %v32 = vld [vmem:[%s0 + $0x18] sm:$0xff]
  %v33 = vld [vmem:[%s3] sm:$0xff]
  %v34 = vld [vmem:[%s3 + $0x8] sm:$0xff]
  %v35 = vld [vmem:[%s3 + $0x10] sm:$0xff]
  %v36 = vld [vmem:[%s3 + $0x18] sm:$0xff]
  %v37 = vld [vmem:[%s3 + $0x20] sm:$0xff]
  %v38 = vld [vmem:[%s3 + $0x28] sm:$0xff]
  %v39 = vld [vmem:[%s3 + $0x30] sm:$0xff]
  %v40 = vld [vmem:[%s3 + $0x38] sm:$0xff]
  %v41 = vld [vmem:[%s3 + $0x40] sm:$0xff]
  %v42 = vld [vmem:[%s3 + $0x48] sm:$0xff]
  %v43 = vld [vmem:[%s3 + $0x50] sm:$0xff]
  %v44 = vld [vmem:[%s3 + $0x58] sm:$0xff]
  %v45 = vld [vmem:[%s3 + $0x60] sm:$0xff]
  %v46 = vld [vmem:[%s3 + $0x68] sm:$0xff]
  %v47 = vld [vmem:[%s3 + $0x70] sm:$0xff]
  %v48 = vld [vmem:[%s3 + $0x78] sm:$0xff]
  %v49 = vld [vmem:[%s3 + $0x80] sm:$0xff]
  %v50 = vld [vmem:[%s3 + $0x88] sm:$0xff]
  %v51 = vld [vmem:[%s3 + $0x90] sm:$0xff]
  %v52 = vld [vmem:[%s3 + $0x98] sm:$0xff]
  %v53 = vld [vmem:[%s3 + $0xa0] sm:$0xff]
  %v54 = vld [vmem:[%s3 + $0xa8] sm:$0xff]
  %v55 = vld [vmem:[%s3 + $0xb0] sm:$0xff]
  %v56 = vld [vmem:[%s3 + $0xb8] sm:$0xff]
  %v57 = vld [vmem:[%s3 + $0xc0] sm:$0xff]
  %v58 = vld [vmem:[%s3 + $0xc8] sm:$0xff]
  %v59 = vld [vmem:[%s3 + $0xd0] sm:$0xff]
  %v60 = vld [vmem:[%s3 + $0xd8] sm:$0xff]
  %v61 = vld [vmem:[%s3 + $0xe0] sm:$0xff]
  %v62 = vld [vmem:[%s3 + $0xe8] sm:$0xff]
  %v63 = vld [vmem:[%s3 + $0xf0] sm:$0xff]
  %v64 = vld [vmem:[%s3 + $0xf8] sm:$0xff]
  %v65 = vld [vmem:[%s3 + $0x100] sm:$0xff]
  %v66 = vld [vmem:[%s3 + $0x108] sm:$0xff]
  %v67 = vld [vmem:[%s3 + $0x110] sm:$0xff]
  %v68 = vld [vmem:[%s3 + $0x118] sm:$0xff]
  %v69 = vld [vmem:[%s3 + $0x120] sm:$0xff]
  %v70 = vld [vmem:[%s3 + $0x128] sm:$0xff]
  %v71 = vld [vmem:[%s3 + $0x130] sm:$0xff]
  %v72 = vld [vmem:[%s3 + $0x138] sm:$0xff]
  %v73 = vld [vmem:[%s3 + $0x140] sm:$0x11]
  %v74 = vld [vmem:[%s3 + $0x148] sm:$0x11]
  %v75 = vld [vmem:[%s6] ss:$8 sm:$0xf]
  %v77 = vperm.slane %v75, 0
  %v78 = vperm.slane %v75, 1
  %v79 = vperm.slane %v75, 2
  %v80 = vperm.slane %v75, 3
  %v89 = vunpack.c.l.b16 %v29
  %v90 = vunpack.c.h.b16 %v29
  %v91 = vunpack.c.l.b16 %v30
  %v92 = vunpack.c.h.b16 %v30
  %v93 = vunpack.c.l.b16 %v31
  %v94 = vunpack.c.h.b16 %v31
  %v95 = vunpack.c.l.b16 %v32
  %v96 = vunpack.c.h.b16 %v32
  %v97 = vpack.c.b16 %v91, %v89
  %v98 = vpack.c.b16 %v92, %v90
  %v99 = vpack.c.b16 %v95, %v93
  %v100 = vpack.c.b16 %v96, %v94
  %v145 = vunpack.c.l.b16 %v33
  %v146 = vunpack.c.h.b16 %v33
  %v147 = vunpack.c.l.b16 %v34
  %v148 = vunpack.c.h.b16 %v34
  %v149 = vunpack.c.l.b16 %v35
  %v150 = vunpack.c.h.b16 %v35
  %v151 = vunpack.c.l.b16 %v36
  %v152 = vunpack.c.h.b16 %v36
  %v153 = vunpack.c.l.b16 %v37
  %v154 = vunpack.c.h.b16 %v37
  %v155 = vunpack.c.l.b16 %v38
  %v156 = vunpack.c.h.b16 %v38
  %v157 = vunpack.c.l.b16 %v39
  %v158 = vunpack.c.h.b16 %v39
  %v159 = vunpack.c.l.b16 %v40
  %v160 = vunpack.c.h.b16 %v40
  %v161 = vunpack.c.l.b16 %v41
  %v162 = vunpack.c.h.b16 %v41
  %v163 = vunpack.c.l.b16 %v42
  %v164 = vunpack.c.h.b16 %v42
  %v165 = vunpack.c.l.b16 %v43
  %v166 = vunpack.c.h.b16 %v43
  %v167 = vunpack.c.l.b16 %v44
  %v168 = vunpack.c.h.b16 %v44
  %v169 = vunpack.c.l.b16 %v45
  %v170 = vunpack.c.h.b16 %v45
  %v171 = vunpack.c.l.b16 %v46
  %v172 = vunpack.c.h.b16 %v46
  %v173 = vunpack.c.l.b16 %v47
  %v174 = vunpack.c.h.b16 %v47
  %v175 = vunpack.c.l.b16 %v48
  %v176 = vunpack.c.h.b16 %v48
  %v177 = vunpack.c.l.b16 %v49
  %v178 = vunpack.c.h.b16 %v49
  %v179 = vunpack.c.l.b16 %v50
  %v180 = vunpack.c.h.b16 %v50
  %v181 = vunpack.c.l.b16 %v51
  %v182 = vunpack.c.h.b16 %v51
  %v183 = vunpack.c.l.b16 %v52
  %v184 = vunpack.c.h.b16 %v52
  %v185 = vunpack.c.l.b16 %v53
  %v186 = vunpack.c.h.b16 %v53
  %v187 = vunpack.c.l.b16 %v54
  %v188 = vunpack.c.h.b16 %v54
  %v189 = vunpack.c.l.b16 %v55
  %v190 = vunpack.c.h.b16 %v55
  %v191 = vunpack.c.l.b16 %v56
  %v192 = vunpack.c.h.b16 %v56
  %v193 = vunpack.c.l.b16 %v57
  %v194 = vunpack.c.h.b16 %v57
  %v195 = vunpack.c.l.b16 %v58
  %v196 = vunpack.c.h.b16 %v58
  %v197 = vunpack.c.l.b16 %v59
  %v198 = vunpack.c.h.b16 %v59
  %v199 = vunpack.c.l.b16 %v60
  %v200 = vunpack.c.h.b16 %v60
  %v201 = vunpack.c.l.b16 %v61
  %v202 = vunpack.c.h.b16 %v61
  %v203 = vunpack.c.l.b16 %v62
  %v204 = vunpack.c.h.b16 %v62
  %v205 = vunpack.c.l.b16 %v63
  %v206 = vunpack.c.h.b16 %v63
  %v207 = vunpack.c.l.b16 %v64
  %v208 = vunpack.c.h.b16 %v64
  %v209 = vunpack.c.l.b16 %v65
  %v210 = vunpack.c.h.b16 %v65
  %v211 = vunpack.c.l.b16 %v66
  %v212 = vunpack.c.h.b16 %v66
  %v213 = vunpack.c.l.b16 %v67
  %v214 = vunpack.c.h.b16 %v67
  %v215 = vunpack.c.l.b16 %v68
  %v216 = vunpack.c.h.b16 %v68
  %v217 = vunpack.c.l.b16 %v69
  %v218 = vunpack.c.h.b16 %v69
  %v219 = vunpack.c.l.b16 %v70
  %v220 = vunpack.c.h.b16 %v70
  %v221 = vunpack.c.l.b16 %v71
  %v222 = vunpack.c.h.b16 %v71
  %v223 = vunpack.c.l.b16 %v72
  %v224 = vunpack.c.h.b16 %v72
  %v225 = vunpack.c.l.b16 %v73
  %v226 = vunpack.c.h.b16 %v73
  %v227 = vunpack.c.l.b16 %v74
  %v228 = vunpack.c.h.b16 %v74
  %v229 = vpack.c.b16 %v149, %v145
  %v230 = vpack.c.b16 %v150, %v146
  %v231 = vpack.c.b16 %v151, %v147
  %v232 = vpack.c.b16 %v152, %v148
  %v233 = vpack.c.b16 %v157, %v153
  %v234 = vpack.c.b16 %v158, %v154
  %v235 = vpack.c.b16 %v159, %v155
  %v236 = vpack.c.b16 %v160, %v156
  %v237 = vpack.c.b16 %v165, %v161
  %v238 = vpack.c.b16 %v166, %v162
  %v239 = vpack.c.b16 %v167, %v163
  %v240 = vpack.c.b16 %v168, %v164
  %v241 = vpack.c.b16 %v173, %v169
  %v242 = vpack.c.b16 %v174, %v170
  %v243 = vpack.c.b16 %v175, %v171
  %v244 = vpack.c.b16 %v176, %v172
  %v245 = vpack.c.b16 %v181, %v177
  %v246 = vpack.c.b16 %v182, %v178
  %v247 = vpack.c.b16 %v183, %v179
  %v248 = vpack.c.b16 %v184, %v180
  %v249 = vpack.c.b16 %v189, %v185
  %v250 = vpack.c.b16 %v190, %v186
  %v251 = vpack.c.b16 %v191, %v187
  %v252 = vpack.c.b16 %v192, %v188
  %v253 = vpack.c.b16 %v197, %v193
  %v254 = vpack.c.b16 %v198, %v194
  %v255 = vpack.c.b16 %v199, %v195
  %v256 = vpack.c.b16 %v200, %v196
  %v257 = vpack.c.b16 %v205, %v201
  %v258 = vpack.c.b16 %v206, %v202
  %v259 = vpack.c.b16 %v207, %v203
  %v260 = vpack.c.b16 %v208, %v204
  %v261 = vpack.c.b16 %v213, %v209
  %v262 = vpack.c.b16 %v214, %v210
  %v263 = vpack.c.b16 %v215, %v211
  %v264 = vpack.c.b16 %v216, %v212
  %v265 = vpack.c.b16 %v221, %v217
  %v266 = vpack.c.b16 %v222, %v218
  %v267 = vpack.c.b16 %v223, %v219
  %v268 = vpack.c.b16 %v224, %v220
  %v269 = vpack.c.b16 %v225, %v225
  %v270 = vpack.c.b16 %v226, %v226
  %v271 = vpack.c.b16 %v227, %v227
  %v272 = vpack.c.b16 %v228, %v228
  %vm313 = vcmask 277504
  %v315 = vsel %vm313, %v98, 0
  %v318 = vsel %vm313, %v100, 0
  %vm320 = vcmask 1040384
  %v322 = vsel %vm320, %v269, 0
  %v325 = vsel %vm320, %v270, 0
  %v328 = vsel %vm320, %v271, 0
  %v331 = vsel %vm320, %v272, 0
  %333 = vmatpush.bf16.msra.mxu0 %v257
  %334 = vmatpush.bf16.msra.mxu0 %v253
  %335 = vmatpush.bf16.msra.mxu0 %v249
  %336 = vmatpush.bf16.msra.mxu0 %v245
  %337 = vmatpush.bf16.msra.mxu0 %v241
  %338 = vmatpush.bf16.msra.mxu0 %v237
  %339 = vmatpush.bf16.msra.mxu0 %v233
  %340 = vmatpush.bf16.msra.mxu0 %v229
  %341 = vmatmul.bf16.gmra.mxu0 %v97
  %v342 = vpop.f32.mrf.mxu0
  %v343 = vadd.f32 %v77, %v342
  %v344 = vpop.f32.mrf.mxu0
  %v345 = vadd.f32 %v77, %v344
  %346 = vmatmul.bf16.gmra.mxu0 %v99
  %v347 = vpop.f32.mrf.mxu0
  %v348 = vadd.f32 %v77, %v347
  %v349 = vpop.f32.mrf.mxu0
  %v350 = vadd.f32 %v77, %v349
  %351 = vdwg.mxu0
  %352 = vmatpush.bf16.msra.mxu0 0
  %353 = vmatpush.bf16.msra.mxu0 0
  %354 = vmatpush.bf16.msra.mxu0 0
  %355 = vmatpush.bf16.msra.mxu0 0
  %356 = vmatpush.bf16.msra.mxu0 0
  %357 = vmatpush.bf16.msra.mxu0 %v322
  %358 = vmatpush.bf16.msra.mxu0 %v265
  %359 = vmatpush.bf16.msra.mxu0 %v261
  %360 = vmatmul.bf16.gmra.mxu0 %v315
  %v361 = vpop.f32.mrf.mxu0
  %v362 = vadd.f32 %v343, %v361
  %v363 = vpop.f32.mrf.mxu0
  %v364 = vadd.f32 %v345, %v363
  %365 = vmatmul.bf16.gmra.mxu0 %v318
  %v366 = vpop.f32.mrf.mxu0
  %v367 = vadd.f32 %v348, %v366
  %v368 = vpop.f32.mrf.mxu0
  %v369 = vadd.f32 %v350, %v368
  %370 = vdwg.mxu0
  %371 = vmatpush.bf16.msra.mxu0 %v258
  %372 = vmatpush.bf16.msra.mxu0 %v254
  %373 = vmatpush.bf16.msra.mxu0 %v250
  %374 = vmatpush.bf16.msra.mxu0 %v246
  %375 = vmatpush.bf16.msra.mxu0 %v242
  %376 = vmatpush.bf16.msra.mxu0 %v238
  %377 = vmatpush.bf16.msra.mxu0 %v234
  %378 = vmatpush.bf16.msra.mxu0 %v230
  %379 = vmatmul.bf16.gmra.mxu0 %v97
  %v380 = vpop.f32.mrf.mxu0
  %v381 = vadd.f32 %v78, %v380
  %v382 = vpop.f32.mrf.mxu0
  %v383 = vadd.f32 %v78, %v382
  %384 = vmatmul.bf16.gmra.mxu0 %v99
  %v385 = vpop.f32.mrf.mxu0
  %v386 = vadd.f32 %v78, %v385
  %v387 = vpop.f32.mrf.mxu0
  %v388 = vadd.f32 %v78, %v387
  %389 = vdwg.mxu0
  %390 = vmatpush.bf16.msra.mxu0 0
  %391 = vmatpush.bf16.msra.mxu0 0
  %392 = vmatpush.bf16.msra.mxu0 0
  %393 = vmatpush.bf16.msra.mxu0 0
  %394 = vmatpush.bf16.msra.mxu0 0
  %395 = vmatpush.bf16.msra.mxu0 %v325
  %396 = vmatpush.bf16.msra.mxu0 %v266
  %397 = vmatpush.bf16.msra.mxu0 %v262
  %398 = vmatmul.bf16.gmra.mxu0 %v315
  %v399 = vpop.f32.mrf.mxu0
  %v400 = vadd.f32 %v381, %v399
  %v401 = vpop.f32.mrf.mxu0
  %v402 = vadd.f32 %v383, %v401
  %403 = vmatmul.bf16.gmra.mxu0 %v318
  %v404 = vpop.f32.mrf.mxu0
  %v405 = vadd.f32 %v386, %v404
  %v406 = vpop.f32.mrf.mxu0
  %v407 = vadd.f32 %v388, %v406
  %408 = vdwg.mxu0
  %409 = vmatpush.bf16.msra.mxu0 %v259
  %410 = vmatpush.bf16.msra.mxu0 %v255
  %411 = vmatpush.bf16.msra.mxu0 %v251
  %412 = vmatpush.bf16.msra.mxu0 %v247
  %413 = vmatpush.bf16.msra.mxu0 %v243
  %414 = vmatpush.bf16.msra.mxu0 %v239
  %415 = vmatpush.bf16.msra.mxu0 %v235
  %416 = vmatpush.bf16.msra.mxu0 %v231
  %417 = vmatmul.bf16.gmra.mxu0 %v97
  %v418 = vpop.f32.mrf.mxu0
  %v419 = vadd.f32 %v79, %v418
  %v420 = vpop.f32.mrf.mxu0
  %v421 = vadd.f32 %v79, %v420
  %422 = vmatmul.bf16.gmra.mxu0 %v99
  %v423 = vpop.f32.mrf.mxu0
  %v424 = vadd.f32 %v79, %v423
  %v425 = vpop.f32.mrf.mxu0
  %v426 = vadd.f32 %v79, %v425
  %427 = vdwg.mxu0
  %428 = vmatpush.bf16.msra.mxu0 0
  %429 = vmatpush.bf16.msra.mxu0 0
  %430 = vmatpush.bf16.msra.mxu0 0
  %431 = vmatpush.bf16.msra.mxu0 0
  %432 = vmatpush.bf16.msra.mxu0 0
  %433 = vmatpush.bf16.msra.mxu0 %v328
  %434 = vmatpush.bf16.msra.mxu0 %v267
  %435 = vmatpush.bf16.msra.mxu0 %v263
  %436 = vmatmul.bf16.gmra.mxu0 %v315
  %v437 = vpop.f32.mrf.mxu0
  %v438 = vadd.f32 %v419, %v437
  %v439 = vpop.f32.mrf.mxu0
  %v440 = vadd.f32 %v421, %v439
  %441 = vmatmul.bf16.gmra.mxu0 %v318
  %v442 = vpop.f32.mrf.mxu0
  %v443 = vadd.f32 %v424, %v442
  %v444 = vpop.f32.mrf.mxu0
  %v445 = vadd.f32 %v426, %v444
  %446 = vdwg.mxu0
  %447 = vmatpush.bf16.msra.mxu0 %v260
  %448 = vmatpush.bf16.msra.mxu0 %v256
  %449 = vmatpush.bf16.msra.mxu0 %v252
  %450 = vmatpush.bf16.msra.mxu0 %v248
  %451 = vmatpush.bf16.msra.mxu0 %v244
  %452 = vmatpush.bf16.msra.mxu0 %v240
  %453 = vmatpush.bf16.msra.mxu0 %v236
  %454 = vmatpush.bf16.msra.mxu0 %v232
  %455 = vmatmul.bf16.gmra.mxu0 %v97
  %v456 = vpop.f32.mrf.mxu0
  %v457 = vadd.f32 %v80, %v456
  %v458 = vpop.f32.mrf.mxu0
  %v459 = vadd.f32 %v80, %v458
  %460 = vmatmul.bf16.gmra.mxu0 %v99
  %v461 = vpop.f32.mrf.mxu0
  %v462 = vadd.f32 %v80, %v461
  %v463 = vpop.f32.mrf.mxu0
  %v464 = vadd.f32 %v80, %v463
  %465 = vdwg.mxu0
  %466 = vmatpush.bf16.msra.mxu0 0
  %467 = vmatpush.bf16.msra.mxu0 0
  %468 = vmatpush.bf16.msra.mxu0 0
  %469 = vmatpush.bf16.msra.mxu0 0
  %470 = vmatpush.bf16.msra.mxu0 0
  %471 = vmatpush.bf16.msra.mxu0 %v331
  %472 = vmatpush.bf16.msra.mxu0 %v268
  %473 = vmatpush.bf16.msra.mxu0 %v264
  %474 = vmatmul.bf16.gmra.mxu0 %v315
  %v475 = vpop.f32.mrf.mxu0
  %v476 = vadd.f32 %v457, %v475
  %v477 = vpop.f32.mrf.mxu0
  %v478 = vadd.f32 %v459, %v477
  %479 = vmatmul.bf16.gmra.mxu0 %v318
  %v480 = vpop.f32.mrf.mxu0
  %v481 = vadd.f32 %v462, %v480
  %v482 = vpop.f32.mrf.mxu0
  %v483 = vadd.f32 %v464, %v482
  %484 = vdwg.mxu0
  %v485 = vmax.f32 %v362, 0.0
  %v486 = vmax.f32 %v400, 0.0
  %v487 = vmax.f32 %v438, 0.0
  %v488 = vmax.f32 %v476, 0.0
  %v489 = vmax.f32 %v364, 0.0
  %v490 = vmax.f32 %v402, 0.0
  %v491 = vmax.f32 %v440, 0.0
  %v492 = vmax.f32 %v478, 0.0
  %v493 = vmax.f32 %v367, 0.0
  %v494 = vmax.f32 %v405, 0.0
  %v495 = vmax.f32 %v443, 0.0
  %v496 = vmax.f32 %v481, 0.0
  %v497 = vmax.f32 %v369, 0.0
  %v498 = vmax.f32 %v407, 0.0
  %v499 = vmax.f32 %v445, 0.0
  %v500 = vmax.f32 %v483, 0.0
  %v501 = vld [vmem:[%s5] sm:$0x3]
  %vm502 = vcmask 261120
  %v504 = vsel %vm502, %v501, 0
  %506 = vmatpush.msra.mxu0 0.0
  %507 = vmatpush.msra.mxu0 0.0
  %508 = vmatpush.msra.mxu0 0.0
  %509 = vmatpush.msra.mxu0 0.0
  %510 = vmatpush.msra.mxu0 0.0
  %511 = vmatpush.msra.mxu0 0.0
  %512 = vmatpush.msra.mxu0 0.0
  %513 = vmatpush.msra.mxu0 0.0
  %514 = vmatpush.msra.mxu0 0.0
  %515 = vmatpush.msra.mxu0 0.0
  %516 = vmatpush.msra.mxu0 0.0
  %517 = vmatpush.msra.mxu0 0.0
  %518 = vmatpush.msra.mxu0 %v497
  %519 = vmatpush.msra.mxu0 %v493
  %520 = vmatpush.msra.mxu0 %v489
  %521 = vmatpush.msra.mxu0 %v485
  %522 = vmatmul.f32.gmra.mxu0 %v504
  %v523 = vpop.f32.mrf.mxu0
  %v524 = vadd.f32 0.0, %v523
  %525 = vdwg.mxu0
  %526 = vmatpush.msra.mxu0 0.0
  %527 = vmatpush.msra.mxu0 0.0
  %528 = vmatpush.msra.mxu0 0.0
  %529 = vmatpush.msra.mxu0 0.0
  %530 = vmatpush.msra.mxu0 0.0
  %531 = vmatpush.msra.mxu0 0.0
  %532 = vmatpush.msra.mxu0 0.0
  %533 = vmatpush.msra.mxu0 0.0
  %534 = vmatpush.msra.mxu0 0.0
  %535 = vmatpush.msra.mxu0 0.0
  %536 = vmatpush.msra.mxu0 0.0
  %537 = vmatpush.msra.mxu0 0.0
  %538 = vmatpush.msra.mxu0 %v498
  %539 = vmatpush.msra.mxu0 %v494
  %540 = vmatpush.msra.mxu0 %v490
  %541 = vmatpush.msra.mxu0 %v486
  %542 = vmatmul.f32.gmra.mxu0 %v504
  %v543 = vpop.f32.mrf.mxu0
  %v544 = vadd.f32 0.0, %v543
  %545 = vdwg.mxu0
  %546 = vmatpush.msra.mxu0 0.0
  %547 = vmatpush.msra.mxu0 0.0
  %548 = vmatpush.msra.mxu0 0.0
  %549 = vmatpush.msra.mxu0 0.0
  %550 = vmatpush.msra.mxu0 0.0
  %551 = vmatpush.msra.mxu0 0.0
  %552 = vmatpush.msra.mxu0 0.0
  %553 = vmatpush.msra.mxu0 0.0
  %554 = vmatpush.msra.mxu0 0.0
  %555 = vmatpush.msra.mxu0 0.0
  %556 = vmatpush.msra.mxu0 0.0
  %557 = vmatpush.msra.mxu0 0.0
  %558 = vmatpush.msra.mxu0 %v499
  %559 = vmatpush.msra.mxu0 %v495
  %560 = vmatpush.msra.mxu0 %v491
  %561 = vmatpush.msra.mxu0 %v487
  %562 = vmatmul.f32.gmra.mxu0 %v504
  %v563 = vpop.f32.mrf.mxu0
  %v564 = vadd.f32 0.0, %v563
  %565 = vdwg.mxu0
  %566 = vmatpush.msra.mxu0 0.0
  %567 = vmatpush.msra.mxu0 0.0
  %568 = vmatpush.msra.mxu0 0.0
  %569 = vmatpush.msra.mxu0 0.0
  %570 = vmatpush.msra.mxu0 0.0
  %571 = vmatpush.msra.mxu0 0.0
  %572 = vmatpush.msra.mxu0 0.0
  %573 = vmatpush.msra.mxu0 0.0
  %574 = vmatpush.msra.mxu0 0.0
  %575 = vmatpush.msra.mxu0 0.0
  %576 = vmatpush.msra.mxu0 0.0
  %577 = vmatpush.msra.mxu0 0.0
  %578 = vmatpush.msra.mxu0 %v500
  %579 = vmatpush.msra.mxu0 %v496
  %580 = vmatpush.msra.mxu0 %v492
  %581 = vmatpush.msra.mxu0 %v488
  %582 = vmatmul.f32.gmra.mxu0 %v504
  %v583 = vpop.f32.mrf.mxu0
  %v584 = vadd.f32 0.0, %v583
  %585 = vdwg.mxu0
  %v586 = vpack.c.bf16 %v524, %v524
  %v587 = vpack.c.bf16 %v544, %v544
  %v588 = vpack.c.bf16 %v564, %v564
  %v589 = vpack.c.bf16 %v584, %v584
  %v590 = vld [vmem:[%s4] sm:$0xf]
  %v591 = vld [vmem:[%s4 + $0x4] sm:$0xf]
  %v592 = vld [vmem:[%s4 + $0x8] sm:$0xf]
  %v593 = vld [vmem:[%s4 + $0xc] sm:$0xf]
  %v594 = vld [vmem:[%s4 + $0x10] sm:$0xf]
  %v595 = vld [vmem:[%s4 + $0x14] sm:$0xf]
  %v596 = vld [vmem:[%s4 + $0x18] sm:$0xf]
  %v597 = vld [vmem:[%s4 + $0x1c] sm:$0xf]
  %v598 = vld [vmem:[%s4 + $0x20] sm:$0xf]
  %v599 = vld [vmem:[%s4 + $0x24] sm:$0xf]
  %v600 = vld [vmem:[%s4 + $0x28] sm:$0xf]
  %v601 = vld [vmem:[%s4 + $0x2c] sm:$0xf]
  %v602 = vld [vmem:[%s4 + $0x30] sm:$0xf]
  %v603 = vld [vmem:[%s4 + $0x34] sm:$0xf]
  %v604 = vld [vmem:[%s4 + $0x38] sm:$0xf]
  %v605 = vld [vmem:[%s4 + $0x3c] sm:$0xf]
  %v606 = vld [vmem:[%s4 + $0x40] sm:$0xf]
  %v607 = vld [vmem:[%s4 + $0x44] sm:$0xf]
  %v608 = vld [vmem:[%s4 + $0x48] sm:$0xf]
  %v609 = vld [vmem:[%s4 + $0x4c] sm:$0xf]
  %v610 = vld [vmem:[%s4 + $0x50] sm:$0xf]
  %v611 = vld [vmem:[%s4 + $0x54] sm:$0xf]
  %v612 = vld [vmem:[%s4 + $0x58] sm:$0xf]
  %v613 = vld [vmem:[%s4 + $0x5c] sm:$0xf]
  %v614 = vld [vmem:[%s4 + $0x60] sm:$0xf]
  %v615 = vld [vmem:[%s4 + $0x64] sm:$0xf]
  %v616 = vld [vmem:[%s4 + $0x68] sm:$0xf]
  %v617 = vld [vmem:[%s4 + $0x6c] sm:$0xf]
  %v618 = vld [vmem:[%s4 + $0x70] sm:$0xf]
  %v619 = vld [vmem:[%s4 + $0x74] sm:$0xf]
  %v620 = vld [vmem:[%s4 + $0x78] sm:$0xf]
  %v621 = vld [vmem:[%s4 + $0x7c] sm:$0xf]
  %v622 = vld [vmem:[%s4 + $0x80] sm:$0xf]
  %v623 = vld [vmem:[%s4 + $0x84] sm:$0xf]
  %v624 = vld [vmem:[%s4 + $0x88] sm:$0xf]
  %v625 = vld [vmem:[%s4 + $0x8c] sm:$0xf]
  %v626 = vld [vmem:[%s4 + $0x90] sm:$0xf]
  %v627 = vld [vmem:[%s4 + $0x94] sm:$0xf]
  %v628 = vld [vmem:[%s4 + $0x98] sm:$0xf]
  %v629 = vld [vmem:[%s4 + $0x9c] sm:$0xf]
  %v630 = vld [vmem:[%s4 + $0xa0] sm:$0xf]
  %v631 = vld [vmem:[%s4 + $0xa4] sm:$0xf]
  %v632 = vld [vmem:[%s4 + $0xa8] sm:$0xf]
  %v633 = vld [vmem:[%s4 + $0xac] sm:$0xf]
  %v634 = vld [vmem:[%s4 + $0xb0] sm:$0xf]
  %v635 = vld [vmem:[%s4 + $0xb4] sm:$0xf]
  %v636 = vld [vmem:[%s4 + $0xb8] sm:$0xf]
  %v637 = vld [vmem:[%s4 + $0xbc] sm:$0xf]
  %v638 = vld [vmem:[%s4 + $0xc0] sm:$0xf]
  %v639 = vld [vmem:[%s4 + $0xc4] sm:$0xf]
  %v640 = vld [vmem:[%s4 + $0xc8] sm:$0xf]
  %v641 = vld [vmem:[%s4 + $0xcc] sm:$0xf]
  %v642 = vld [vmem:[%s4 + $0xd0] sm:$0xf]
  %v643 = vld [vmem:[%s4 + $0xd4] sm:$0xf]
  %v644 = vld [vmem:[%s4 + $0xd8] sm:$0xf]
  %v645 = vld [vmem:[%s4 + $0xdc] sm:$0xf]
  %v646 = vld [vmem:[%s4 + $0xe0] sm:$0xf]
  %v647 = vld [vmem:[%s4 + $0xe4] sm:$0xf]
  %v648 = vld [vmem:[%s4 + $0xe8] sm:$0xf]
  %v649 = vld [vmem:[%s4 + $0xec] sm:$0xf]
  %v650 = vld [vmem:[%s4 + $0xf0] sm:$0xf]
  %v651 = vld [vmem:[%s4 + $0xf4] sm:$0xf]
  %v652 = vld [vmem:[%s4 + $0xf8] sm:$0xf]
  %v653 = vld [vmem:[%s4 + $0xfc] sm:$0xf]
  %v654 = vld [vmem:[%s5 + $0x8] sm:$0x1]
  %v655 = vperm.slane %v654, 0
  %v720 = vunpack.c.l.b16 %v590
  %v721 = vunpack.c.l.b16 %v591
  %v722 = vunpack.c.l.b16 %v592
  %v723 = vunpack.c.l.b16 %v593
  %v724 = vunpack.c.l.b16 %v594
  %v725 = vunpack.c.l.b16 %v595
  %v726 = vunpack.c.l.b16 %v596
  %v727 = vunpack.c.l.b16 %v597
  %v728 = vunpack.c.l.b16 %v598
  %v729 = vunpack.c.l.b16 %v599
  %v730 = vunpack.c.l.b16 %v600
  %v731 = vunpack.c.l.b16 %v601
  %v732 = vunpack.c.l.b16 %v602
  %v733 = vunpack.c.l.b16 %v603
  %v734 = vunpack.c.l.b16 %v604
  %v735 = vunpack.c.l.b16 %v605
  %v736 = vunpack.c.l.b16 %v606
  %v737 = vunpack.c.l.b16 %v607
  %v738 = vunpack.c.l.b16 %v608
  %v739 = vunpack.c.l.b16 %v609
  %v740 = vunpack.c.l.b16 %v610
  %v741 = vunpack.c.l.b16 %v611
  %v742 = vunpack.c.l.b16 %v612
  %v743 = vunpack.c.l.b16 %v613
  %v744 = vunpack.c.l.b16 %v614
  %v745 = vunpack.c.l.b16 %v615
  %v746 = vunpack.c.l.b16 %v616
  %v747 = vunpack.c.l.b16 %v617
  %v748 = vunpack.c.l.b16 %v618
  %v749 = vunpack.c.l.b16 %v619
  %v750 = vunpack.c.l.b16 %v620
  %v751 = vunpack.c.l.b16 %v621
  %v752 = vunpack.c.l.b16 %v622
  %v753 = vunpack.c.l.b16 %v623
  %v754 = vunpack.c.l.b16 %v624
  %v755 = vunpack.c.l.b16 %v625
  %v756 = vunpack.c.l.b16 %v626
  %v757 = vunpack.c.l.b16 %v627
  %v758 = vunpack.c.l.b16 %v628
  %v759 = vunpack.c.l.b16 %v629
  %v760 = vunpack.c.l.b16 %v630
  %v761 = vunpack.c.l.b16 %v631
  %v762 = vunpack.c.l.b16 %v632
  %v763 = vunpack.c.l.b16 %v633
  %v764 = vunpack.c.l.b16 %v634
  %v765 = vunpack.c.l.b16 %v635
  %v766 = vunpack.c.l.b16 %v636
  %v767 = vunpack.c.l.b16 %v637
  %v768 = vunpack.c.l.b16 %v638
  %v769 = vunpack.c.l.b16 %v639
  %v770 = vunpack.c.l.b16 %v640
  %v771 = vunpack.c.l.b16 %v641
  %v772 = vunpack.c.l.b16 %v642
  %v773 = vunpack.c.l.b16 %v643
  %v774 = vunpack.c.l.b16 %v644
  %v775 = vunpack.c.l.b16 %v645
  %v776 = vunpack.c.l.b16 %v646
  %v777 = vunpack.c.l.b16 %v647
  %v778 = vunpack.c.l.b16 %v648
  %v779 = vunpack.c.l.b16 %v649
  %v780 = vunpack.c.l.b16 %v650
  %v781 = vunpack.c.l.b16 %v651
  %v782 = vunpack.c.l.b16 %v652
  %v783 = vunpack.c.l.b16 %v653
  %v784 = vpack.c.b16 %v721, %v720
  %v785 = vpack.c.b16 %v723, %v722
  %v786 = vpack.c.b16 %v725, %v724
  %v787 = vpack.c.b16 %v727, %v726
  %v788 = vpack.c.b16 %v729, %v728
  %v789 = vpack.c.b16 %v731, %v730
  %v790 = vpack.c.b16 %v733, %v732
  %v791 = vpack.c.b16 %v735, %v734
  %v792 = vpack.c.b16 %v737, %v736
  %v793 = vpack.c.b16 %v739, %v738
  %v794 = vpack.c.b16 %v741, %v740
  %v795 = vpack.c.b16 %v743, %v742
  %v796 = vpack.c.b16 %v745, %v744
  %v797 = vpack.c.b16 %v747, %v746
  %v798 = vpack.c.b16 %v749, %v748
  %v799 = vpack.c.b16 %v751, %v750
  %v800 = vpack.c.b16 %v753, %v752
  %v801 = vpack.c.b16 %v755, %v754
  %v802 = vpack.c.b16 %v757, %v756
  %v803 = vpack.c.b16 %v759, %v758
  %v804 = vpack.c.b16 %v761, %v760
  %v805 = vpack.c.b16 %v763, %v762
  %v806 = vpack.c.b16 %v765, %v764
  %v807 = vpack.c.b16 %v767, %v766
  %v808 = vpack.c.b16 %v769, %v768
  %v809 = vpack.c.b16 %v771, %v770
  %v810 = vpack.c.b16 %v773, %v772
  %v811 = vpack.c.b16 %v775, %v774
  %v812 = vpack.c.b16 %v777, %v776
  %v813 = vpack.c.b16 %v779, %v778
  %v814 = vpack.c.b16 %v781, %v780
  %v815 = vpack.c.b16 %v783, %v782
  %848 = vmatpush.bf16.msra.mxu0 %v791
  %849 = vmatpush.bf16.msra.mxu0 %v790
  %850 = vmatpush.bf16.msra.mxu0 %v789
  %851 = vmatpush.bf16.msra.mxu0 %v788
  %852 = vmatpush.bf16.msra.mxu0 %v787
  %853 = vmatpush.bf16.msra.mxu0 %v786
  %854 = vmatpush.bf16.msra.mxu0 %v785
  %855 = vmatpush.bf16.msra.mxu0 %v784
  %856 = vmatmul.bf16.gmra.mxu0 %v586
  %v857 = vpop.f32.mrf.mxu0
  %v858 = vadd.f32 %v655, %v857
  %v859 = vpop.f32.mrf.mxu0
  %860 = vdwg.mxu0
  %861 = vmatpush.bf16.msra.mxu0 %v799
  %862 = vmatpush.bf16.msra.mxu0 %v798
  %863 = vmatpush.bf16.msra.mxu0 %v797
  %864 = vmatpush.bf16.msra.mxu0 %v796
  %865 = vmatpush.bf16.msra.mxu0 %v795
  %866 = vmatpush.bf16.msra.mxu0 %v794
  %867 = vmatpush.bf16.msra.mxu0 %v793
  %868 = vmatpush.bf16.msra.mxu0 %v792
  %869 = vmatmul.bf16.gmra.mxu0 %v587
  %v870 = vpop.f32.mrf.mxu0
  %v871 = vadd.f32 %v858, %v870
  %v872 = vpop.f32.mrf.mxu0
  %873 = vdwg.mxu0
  %874 = vmatpush.bf16.msra.mxu0 %v807
  %875 = vmatpush.bf16.msra.mxu0 %v806
  %876 = vmatpush.bf16.msra.mxu0 %v805
  %877 = vmatpush.bf16.msra.mxu0 %v804
  %878 = vmatpush.bf16.msra.mxu0 %v803
  %879 = vmatpush.bf16.msra.mxu0 %v802
  %880 = vmatpush.bf16.msra.mxu0 %v801
  %881 = vmatpush.bf16.msra.mxu0 %v800
  %882 = vmatmul.bf16.gmra.mxu0 %v588
  %v883 = vpop.f32.mrf.mxu0
  %v884 = vadd.f32 %v871, %v883
  %v885 = vpop.f32.mrf.mxu0
  %886 = vdwg.mxu0
  %887 = vmatpush.bf16.msra.mxu0 %v815
  %888 = vmatpush.bf16.msra.mxu0 %v814
  %889 = vmatpush.bf16.msra.mxu0 %v813
  %890 = vmatpush.bf16.msra.mxu0 %v812
  %891 = vmatpush.bf16.msra.mxu0 %v811
  %892 = vmatpush.bf16.msra.mxu0 %v810
  %893 = vmatpush.bf16.msra.mxu0 %v809
  %894 = vmatpush.bf16.msra.mxu0 %v808
  %895 = vmatmul.bf16.gmra.mxu0 %v589
  %v896 = vpop.f32.mrf.mxu0
  %v897 = vadd.f32 %v884, %v896
  %v898 = vpop.f32.mrf.mxu0
  %899 = vdwg.mxu0
  %v900 = vld [vmem:[%s5 + $0x10] sm:$0xff]
  %v901 = vld [vmem:[%s5 + $0x18] sm:$0xff]
  %v902 = vld [vmem:[%s5 + $0x20] sm:$0xff]
  %v903 = vld [vmem:[%s5 + $0x28] sm:$0xff]
  %v904 = vld [vmem:[%s5 + $0x30] sm:$0xff]
  %v905 = vld [vmem:[%s5 + $0x38] sm:$0xff]
  %v906 = vld [vmem:[%s5 + $0x40] sm:$0xff]
  %v907 = vld [vmem:[%s5 + $0x48] sm:$0xff]
  %v908 = vld [vmem:[%s5 + $0x50] sm:$0x1]
  %v909 = vld [vmem:[%s5 + $0x58] sm:$0xff]
  %v910 = vld [vmem:[%s5 + $0x60] sm:$0xff]
  %v911 = vld [vmem:[%s5 + $0x68] sm:$0xff]
  %v912 = vld [vmem:[%s5 + $0x70] sm:$0xff]
  %v913 = vld [vmem:[%s5 + $0x78] sm:$0x1]
  %v914 = vld [vmem:[%s5 + $0x80] sm:$0x1]
  %v915 = vld [vmem:[%s5 + $0x88] sm:$0x1]
  %v916 = vperm.slane %v908, 0
  %vm917 = vcmask 523264
  %v919 = vsel %vm917, %v897, 0
  %921 = vmatpush.msra.mxu0 0.0
  %922 = vmatpush.msra.mxu0 0.0
  %923 = vmatpush.msra.mxu0 0.0
  %924 = vmatpush.msra.mxu0 0.0
  %925 = vmatpush.msra.mxu0 0.0
  %926 = vmatpush.msra.mxu0 0.0
  %927 = vmatpush.msra.mxu0 0.0
  %928 = vmatpush.msra.mxu0 0.0
  %929 = vmatpush.msra.mxu0 %v907
  %930 = vmatpush.msra.mxu0 %v906
  %931 = vmatpush.msra.mxu0 %v905
  %932 = vmatpush.msra.mxu0 %v904
  %933 = vmatpush.msra.mxu0 %v903
  %934 = vmatpush.msra.mxu0 %v902
  %935 = vmatpush.msra.mxu0 %v901
  %936 = vmatpush.msra.mxu0 %v900
  %937 = vmatmul.f32.gmra.mxu0 %v919
  %v938 = vpop.f32.mrf.mxu0
  %v939 = vadd.f32 %v916, %v938
  %940 = vdwg.mxu0
  %v941 = vmul.f32 %v939, %v939
  %v942 = vmul.f32 %v939, %v941
  %v943 = vmul.f32 %v942, 0.044715
  %v944 = vadd.f32 %v939, %v943
  %v945 = vmul.f32 %v944, 0.7978846
  %v946 = vtanh.pop %v945
  %v947 = vadd.f32 %v946, 1.0
  %v948 = vmul.f32 %v947, 0.5
  %v949 = vmul.f32 %v939, %v948
  %v950 = vperm.slane %v913, 0
  %v952 = vsel %vm502, %v949, 0
  %954 = vmatpush.msra.mxu0 0.0
  %955 = vmatpush.msra.mxu0 0.0
  %956 = vmatpush.msra.mxu0 0.0
  %957 = vmatpush.msra.mxu0 0.0
  %958 = vmatpush.msra.mxu0 0.0
  %959 = vmatpush.msra.mxu0 0.0
  %960 = vmatpush.msra.mxu0 0.0
  %961 = vmatpush.msra.mxu0 0.0
  %962 = vmatpush.msra.mxu0 0.0
  %963 = vmatpush.msra.mxu0 0.0
  %964 = vmatpush.msra.mxu0 0.0
  %965 = vmatpush.msra.mxu0 0.0
  %966 = vmatpush.msra.mxu0 %v912
  %967 = vmatpush.msra.mxu0 %v911
  %968 = vmatpush.msra.mxu0 %v910
  %969 = vmatpush.msra.mxu0 %v909
  %970 = vmatmul.f32.gmra.mxu0 %v952
  %v971 = vpop.f32.mrf.mxu0
  %v972 = vadd.f32 %v950, %v971
  %973 = vdwg.mxu0
  %v974 = vadd.f32 %v972, %v939
  %vm975 = vcmask 254976
  %v976 = vsel %vm975, %v974, 0.0
  %977 = vadd.xlane.f32.xlu0 %v976
  %v978 = vpop.xlane.xlu0 %977
  %v979 = vrcp.pop 32.0
  %v980 = vmul.f32 32.0, %v979
  %v981 = vsub.f32 1.0, %v980
  %v982 = vmul.f32 %v979, %v981
  %v983 = vadd.f32 %v979, %v982
  %vm984 = vweird.f32 %v979
  %v985 = vsel %vm984, %v979, %v983
  %v986 = vmul.f32 %v978, %v985
  %v987 = vsub.f32 %v974, %v986
  %v988 = vmul.f32 %v987, %v987
  %v989 = vsel %vm975, %v988, 0.0
  %990 = vadd.xlane.f32.xlu0 %v989
  %v991 = vpop.xlane.xlu0 %990
  %v992 = vmul.f32 %v991, %v985
  %v993 = vadd.f32 %v992, 1e-05
  %v994 = vrsqrt.pop %v993
  %v995 = vmul.f32 %v994, %v993
  %v996 = vmul.f32 %v995, %v994
  %v997 = vmul.f32 0.5, %v996
  %v998 = vsub.f32 1.5, %v997
  %v999 = vmul.f32 %v994, %v998
  %vm1000 = vweird.f32 %v993
  %vm1001 = vweird.f32 %v994
  %vm1002 = vmor %vm1000, %vm1001
  %v1003 = vsel %vm1002, %v994, %v999
  %v1004 = vmul.f32 %v987, %v1003
  %v1005 = vperm.slane %v914, 0
  %v1006 = vmul.f32 %v1004, %v1005
  %v1007 = vperm.slane %v915, 0
  %v1008 = vadd.f32 %v1006, %v1007
  %v1009 = vld [vmem:[%s1] sm:$0xff]
  %v1010 = vld [vmem:[%s1 + $0x8] sm:$0xf]
  %v1011 = vld [vmem:[%s1 + $0x10] sm:$0xff]
  %v1012 = vld [vmem:[%s1 + $0x18] sm:$0xf]
  %v1013 = vld [vmem:[%s1 + $0x20] sm:$0xff]
  %v1014 = vld [vmem:[%s1 + $0x28] sm:$0xf]
  %v1015 = vld [vmem:[%s1 + $0x30] sm:$0xff]
  %v1016 = vld [vmem:[%s1 + $0x38] sm:$0xf]
  %v1017 = vld [vmem:[%s1 + $0x40] sm:$0xff]
  %v1018 = vld [vmem:[%s1 + $0x48] sm:$0xf]
  %v1019 = vld [vmem:[%s1 + $0x50] sm:$0xff]
  %v1020 = vld [vmem:[%s1 + $0x58] sm:$0xf]
  %v1021 = vld [vmem:[%s1 + $0x60] sm:$0xff]
  %v1022 = vld [vmem:[%s1 + $0x68] sm:$0xf]
  %v1023 = vld [vmem:[%s1 + $0x70] sm:$0xff]
  %v1024 = vld [vmem:[%s1 + $0x78] sm:$0xf]
  %v1025 = vsel %vm502, %v1009, 0.0
  %vm1026 = vcmask 257024
  %v1027 = vsel %vm1026, %v1010, 0.0
  %v1028 = vadd.f32 %v1025, %v1027
  %v1029 = vrot.slane %v1028, 4
  %v1030 = vadd.f32 %v1028, %v1029
  %v1031 = vrot.slane %v1030, 2
  %v1032 = vadd.f32 %v1030, %v1031
  %v1033 = vrot.slane %v1032, 1
  %v1034 = vadd.f32 %v1032, %v1033
  %v1035 = vsel %vm502, %v1011, 0.0
  %v1036 = vsel %vm1026, %v1012, 0.0
  %v1037 = vadd.f32 %v1035, %v1036
  %v1038 = vrot.slane %v1037, 4
  %v1039 = vadd.f32 %v1037, %v1038
  %v1040 = vrot.slane %v1039, 2
  %v1041 = vadd.f32 %v1039, %v1040
  %v1042 = vrot.slane %v1041, 1
  %v1043 = vadd.f32 %v1041, %v1042
  %v1044 = vsel %vm502, %v1013, 0.0
  %v1045 = vsel %vm1026, %v1014, 0.0
  %v1046 = vadd.f32 %v1044, %v1045
  %v1047 = vrot.slane %v1046, 4
  %v1048 = vadd.f32 %v1046, %v1047
  %v1049 = vrot.slane %v1048, 2
  %v1050 = vadd.f32 %v1048, %v1049
  %v1051 = vrot.slane %v1050, 1
  %v1052 = vadd.f32 %v1050, %v1051
  %v1053 = vsel %vm502, %v1015, 0.0
  %v1054 = vsel %vm1026, %v1016, 0.0
  %v1055 = vadd.f32 %v1053, %v1054
  %v1056 = vrot.slane %v1055, 4
  %v1057 = vadd.f32 %v1055, %v1056
  %v1058 = vrot.slane %v1057, 2
  %v1059 = vadd.f32 %v1057, %v1058
  %v1060 = vrot.slane %v1059, 1
  %v1061 = vadd.f32 %v1059, %v1060
  %v1062 = vsel %vm502, %v1017, 0.0
  %v1063 = vsel %vm1026, %v1018, 0.0
  %v1064 = vadd.f32 %v1062, %v1063
  %v1065 = vrot.slane %v1064, 4
  %v1066 = vadd.f32 %v1064, %v1065
  %v1067 = vrot.slane %v1066, 2
  %v1068 = vadd.f32 %v1066, %v1067
  %v1069 = vrot.slane %v1068, 1
  %v1070 = vadd.f32 %v1068, %v1069
  %v1071 = vsel %vm502, %v1019, 0.0
  %v1072 = vsel %vm1026, %v1020, 0.0
  %v1073 = vadd.f32 %v1071, %v1072
  %v1074 = vrot.slane %v1073, 4
  %v1075 = vadd.f32 %v1073, %v1074
  %v1076 = vrot.slane %v1075, 2
  %v1077 = vadd.f32 %v1075, %v1076
  %v1078 = vrot.slane %v1077, 1
  %v1079 = vadd.f32 %v1077, %v1078
  %v1080 = vsel %vm502, %v1021, 0.0
  %v1081 = vsel %vm1026, %v1022, 0.0
  %v1082 = vadd.f32 %v1080, %v1081
  %v1083 = vrot.slane %v1082, 4
  %v1084 = vadd.f32 %v1082, %v1083
  %v1085 = vrot.slane %v1084, 2
  %v1086 = vadd.f32 %v1084, %v1085
  %v1087 = vrot.slane %v1086, 1
  %v1088 = vadd.f32 %v1086, %v1087
  %v1089 = vsel %vm502, %v1023, 0.0
  %v1090 = vsel %vm1026, %v1024, 0.0
  %v1091 = vadd.f32 %v1089, %v1090
  %v1092 = vrot.slane %v1091, 4
  %v1093 = vadd.f32 %v1091, %v1092
  %v1094 = vrot.slane %v1093, 2
  %v1095 = vadd.f32 %v1093, %v1094
  %v1096 = vrot.slane %v1095, 1
  %v1097 = vadd.f32 %v1095, %v1096
  %v1098 = vld [vmem:[%s5 + $0x90] sm:$0xff]
  %v1099 = vld [vmem:[%s5 + $0x98] sm:$0xff]
  %v1100 = vld [vmem:[%s5 + $0xa0] sm:$0xff]
  %v1101 = vld [vmem:[%s5 + $0xa8] sm:$0xff]
  %v1102 = vld [vmem:[%s5 + $0xb0] sm:$0x1]
  %v1103 = vperm.slane %v1102, 0
  %vm1112 = vcmask 1041409
  %v1113 = vsel %vm1112, %v1043, %v1034
  %vm1114 = vcmask 1042434
  %v1115 = vsel %vm1114, %v1052, %v1113
  %vm1116 = vcmask 1043459
  %v1117 = vsel %vm1116, %v1061, %v1115
  %vm1118 = vcmask 1044484
  %v1119 = vsel %vm1118, %v1070, %v1117
  %vm1120 = vcmask 1045509
  %v1121 = vsel %vm1120, %v1079, %v1119
  %vm1122 = vcmask 1046534
  %v1123 = vsel %vm1122, %v1088, %v1121
  %vm1124 = vcmask 1047559
  %v1125 = vsel %vm1124, %v1097, %v1123
  %v1126 = vsel %vm502, %v1125, 0
  %1128 = vmatpush.msra.mxu0 0.0
  %1129 = vmatpush.msra.mxu0 0.0
  %1130 = vmatpush.msra.mxu0 0.0
  %1131 = vmatpush.msra.mxu0 0.0
  %1132 = vmatpush.msra.mxu0 0.0
  %1133 = vmatpush.msra.mxu0 0.0
  %1134 = vmatpush.msra.mxu0 0.0
  %1135 = vmatpush.msra.mxu0 0.0
  %1136 = vmatpush.msra.mxu0 0.0
  %1137 = vmatpush.msra.mxu0 0.0
  %1138 = vmatpush.msra.mxu0 0.0
  %1139 = vmatpush.msra.mxu0 0.0
  %1140 = vmatpush.msra.mxu0 %v1101
  %1141 = vmatpush.msra.mxu0 %v1100
  %1142 = vmatpush.msra.mxu0 %v1099
  %1143 = vmatpush.msra.mxu0 %v1098
  %1144 = vmatmul.f32.gmra.mxu0 %v1126
  %v1145 = vpop.f32.mrf.mxu0
  %v1146 = vadd.f32 %v1103, %v1145
  %1147 = vdwg.mxu0
  %v1148 = vtanh.pop %v1146
  %v1149 = vld [vmem:[%s5 + $0xb8] sm:$0xff]
  %v1150 = vld [vmem:[%s5 + $0xc0] sm:$0xff]
  %v1151 = vld [vmem:[%s5 + $0xc8] sm:$0xff]
  %v1152 = vld [vmem:[%s5 + $0xd0] sm:$0xff]
  %v1153 = vld [vmem:[%s5 + $0xd8] sm:$0x1]
  %v1154 = vld [vmem:[%s5 + $0xe0] sm:$0xff]
  %v1155 = vld [vmem:[%s5 + $0xe8] sm:$0xff]
  %v1156 = vld [vmem:[%s5 + $0xf0] sm:$0xff]
  %v1157 = vld [vmem:[%s5 + $0xf8] sm:$0xff]
  %v1158 = vld [vmem:[%s5 + $0x100] sm:$0x1]
  %v1159 = vld [vmem:[%s5 + $0x108] sm:$0x1]
  %v1160 = vld [vmem:[%s5 + $0x110] sm:$0x1]
  %v1161 = vperm.slane %v1153, 0
  %v1163 = vsel %vm502, %v1148, 0
  %1165 = vmatpush.msra.mxu0 0.0
  %1166 = vmatpush.msra.mxu0 0.0
  %1167 = vmatpush.msra.mxu0 0.0
  %1168 = vmatpush.msra.mxu0 0.0
  %1169 = vmatpush.msra.mxu0 0.0
  %1170 = vmatpush.msra.mxu0 0.0
  %1171 = vmatpush.msra.mxu0 0.0
  %1172 = vmatpush.msra.mxu0 0.0
  %1173 = vmatpush.msra.mxu0 0.0
  %1174 = vmatpush.msra.mxu0 0.0
  %1175 = vmatpush.msra.mxu0 0.0
  %1176 = vmatpush.msra.mxu0 0.0
  %1177 = vmatpush.msra.mxu0 %v1152
  %1178 = vmatpush.msra.mxu0 %v1151
  %1179 = vmatpush.msra.mxu0 %v1150
  %1180 = vmatpush.msra.mxu0 %v1149
  %1181 = vmatmul.f32.gmra.mxu0 %v1163
  %v1182 = vpop.f32.mrf.mxu0
  %v1183 = vadd.f32 %v1161, %v1182
  %1184 = vdwg.mxu0
  %v1185 = vmul.f32 %v1183, %v1183
  %v1186 = vmul.f32 %v1183, %v1185
  %v1187 = vmul.f32 %v1186, 0.044715
  %v1188 = vadd.f32 %v1183, %v1187
  %v1189 = vmul.f32 %v1188, 0.7978846
  %v1190 = vtanh.pop %v1189
  %v1191 = vadd.f32 %v1190, 1.0
  %v1192 = vmul.f32 %v1191, 0.5
  %v1193 = vmul.f32 %v1183, %v1192
  %v1194 = vperm.slane %v1158, 0
  %v1196 = vsel %vm502, %v1193, 0
  %1198 = vmatpush.msra.mxu0 0.0
  %1199 = vmatpush.msra.mxu0 0.0
  %1200 = vmatpush.msra.mxu0 0.0
  %1201 = vmatpush.msra.mxu0 0.0
  %1202 = vmatpush.msra.mxu0 0.0
  %1203 = vmatpush.msra.mxu0 0.0
  %1204 = vmatpush.msra.mxu0 0.0
  %1205 = vmatpush.msra.mxu0 0.0
  %1206 = vmatpush.msra.mxu0 0.0
  %1207 = vmatpush.msra.mxu0 0.0
  %1208 = vmatpush.msra.mxu0 0.0
  %1209 = vmatpush.msra.mxu0 0.0
  %1210 = vmatpush.msra.mxu0 %v1157
  %1211 = vmatpush.msra.mxu0 %v1156
  %1212 = vmatpush.msra.mxu0 %v1155
  %1213 = vmatpush.msra.mxu0 %v1154
  %1214 = vmatmul.f32.gmra.mxu0 %v1196
  %v1215 = vpop.f32.mrf.mxu0
  %v1216 = vadd.f32 %v1194, %v1215
  %1217 = vdwg.mxu0
  %v1218 = vadd.f32 %v1216, %v1183
  %v1219 = vsel %vm502, %v1218, 0.0
  %1220 = vadd.xlane.f32.xlu0 %v1219
  %v1221 = vpop.xlane.xlu0 %1220
  %v1222 = vmul.f32 %v1221, %v985
  %v1223 = vsub.f32 %v1218, %v1222
  %v1224 = vmul.f32 %v1223, %v1223
  %v1225 = vsel %vm502, %v1224, 0.0
  %1226 = vadd.xlane.f32.xlu0 %v1225
  %v1227 = vpop.xlane.xlu0 %1226
  %v1228 = vmul.f32 %v1227, %v985
  %v1229 = vadd.f32 %v1228, 1e-05
  %v1230 = vrsqrt.pop %v1229
  %v1231 = vmul.f32 %v1230, %v1229
  %v1232 = vmul.f32 %v1231, %v1230
  %v1233 = vmul.f32 0.5, %v1232
  %v1234 = vsub.f32 1.5, %v1233
  %v1235 = vmul.f32 %v1230, %v1234
  %vm1236 = vweird.f32 %v1229
  %vm1237 = vweird.f32 %v1230
  %vm1238 = vmor %vm1236, %vm1237
  %v1239 = vsel %vm1238, %v1230, %v1235
  %v1240 = vmul.f32 %v1223, %v1239
  %v1241 = vperm.slane %v1159, 0
  %v1242 = vmul.f32 %v1240, %v1241
  %v1243 = vperm.slane %v1160, 0
  %v1244 = vadd.f32 %v1242, %v1243
  %1245 = vst.msk [vmem:[%s7] sm:$0xff] %vm502, 0.0
  %1246 = vst.msk [vmem:[%s7 + $0x8] sm:$0xff] %vm502, 0.0
  %1247 = vst.msk [vmem:[%s7] sm:$0x3] %vm975, %v1008
  %1248 = vst.msk [vmem:[%s7 + $0x8] sm:$0xff] %vm502, %v1244
  %v1249 = vld [vmem:[%s2] sm:$0xff]
  %vm1250 = vcmask 64512
  %v1252 = vsel %vm1250, %v1249, 0
  %1254 = vmatpush.msra.mxu0 0.0
  %1255 = vmatpush.msra.mxu0 0.0
  %1256 = vmatpush.msra.mxu0 0.0
  %1257 = vmatpush.msra.mxu0 0.0
  %1258 = vmatpush.msra.mxu0 0.0
  %1259 = vmatpush.msra.mxu0 0.0
  %1260 = vmatpush.msra.mxu0 0.0
  %1261 = vmatpush.msra.mxu0 0.0
  %1262 = vmatpush.msra.mxu0 0.0
  %1263 = vmatpush.msra.mxu0 0.0
  %1264 = vmatpush.msra.mxu0 0.0
  %1265 = vmatpush.msra.mxu0 0.0
  %1266 = vmatpush.msra.mxu0 0.0
  %1267 = vmatpush.msra.mxu0 0.0
  %1268 = vmatpush.msra.mxu0 0.0
  %1269 = vmatpush.msra.mxu0 %v1148
  %1270 = vmatmul.f32.gmra.mxu0 %v1252
  %v1271 = vpop.f32.mrf.mxu0
  %v1272 = vadd.f32 0.0, %v1271
  %1273 = vdwg.mxu0
  %1275 = vrot.lane.b32.xlu0 %v1272, 32
  %v1276 = vpop.permute.xlu0 %1275
  %v1278 = vsel %vm502, %v1148, %v1276
  %v1279 = vld [vmem:[%s5 + $0x118] sm:$0xff]
  %v1280 = vld [vmem:[%s5 + $0x120] sm:$0xff]
  %v1281 = vld [vmem:[%s5 + $0x128] sm:$0xff]
  %v1282 = vld [vmem:[%s5 + $0x130] sm:$0xff]
  %v1283 = vld [vmem:[%s5 + $0x138] sm:$0xff]
  %v1284 = vld [vmem:[%s5 + $0x140] sm:$0xff]
  %v1285 = vld [vmem:[%s5 + $0x148] sm:$0xff]
  %v1286 = vld [vmem:[%s5 + $0x150] sm:$0xff]
  %v1287 = vld [vmem:[%s5 + $0x158] sm:$0x1]
  %v1288 = vperm.slane %v1287, 0
  %v1290 = vsel %vm917, %v1278, 0
  %1292 = vmatpush.msra.mxu0 0.0
  %1293 = vmatpush.msra.mxu0 0.0
  %1294 = vmatpush.msra.mxu0 0.0
  %1295 = vmatpush.msra.mxu0 0.0
  %1296 = vmatpush.msra.mxu0 0.0
  %1297 = vmatpush.msra.mxu0 0.0
  %1298 = vmatpush.msra.mxu0 0.0
  %1299 = vmatpush.msra.mxu0 0.0
  %1300 = vmatpush.msra.mxu0 %v1286
  %1301 = vmatpush.msra.mxu0 %v1285
  %1302 = vmatpush.msra.mxu0 %v1284
  %1303 = vmatpush.msra.mxu0 %v1283
  %1304 = vmatpush.msra.mxu0 %v1282
  %1305 = vmatpush.msra.mxu0 %v1281
  %1306 = vmatpush.msra.mxu0 %v1280
  %1307 = vmatpush.msra.mxu0 %v1279
  %1308 = vmatmul.f32.gmra.mxu0 %v1290
  %v1309 = vpop.f32.mrf.mxu0
  %v1310 = vadd.f32 %v1288, %v1309
  %1311 = vdwg.mxu0
  %v1312 = vmax.f32 %v1310, 0.0
  %1313 = vmatpush.msra.mxu0 0.0
  %1314 = vmatpush.msra.mxu0 0.0
  %1315 = vmatpush.msra.mxu0 0.0
  %1316 = vmatpush.msra.mxu0 0.0
  %1317 = vmatpush.msra.mxu0 0.0
  %1318 = vmatpush.msra.mxu0 0.0
  %1319 = vmatpush.msra.mxu0 0.0
  %1320 = vmatpush.msra.mxu0 0.0
  %1321 = vmatpush.msra.mxu0 0.0
  %1322 = vmatpush.msra.mxu0 0.0
  %1323 = vmatpush.msra.mxu0 0.0
  %1324 = vmatpush.msra.mxu0 0.0
  %1325 = vmatpush.msra.mxu0 0.0
  %1326 = vmatpush.msra.mxu0 0.0
  %1327 = vmatpush.msra.mxu0 0.0
  %1328 = vmatpush.msra.mxu0 %v1312
  %1329 = vmatmul.f32.gmra.mxu0 %v1252
  %v1330 = vpop.f32.mrf.mxu0
  %v1331 = vadd.f32 0.0, %v1330
  %1332 = vdwg.mxu0
  %1334 = vrot.lane.b32.xlu0 %v1331, 64
  %v1335 = vpop.permute.xlu0 %1334
  %v1337 = vsel %vm917, %v1312, %v1335
  %v1338 = vld [vmem:[%s6 + $0x20] sm:$0xff]
  %v1339 = vld [vmem:[%s6 + $0x28] sm:$0xff]
  %v1340 = vld [vmem:[%s6 + $0x40] sm:$0xff]
  %v1341 = vld [vmem:[%s6 + $0x48] sm:$0xff]
  %v1342 = vld [vmem:[%s6 + $0x60] sm:$0xff]
  %v1343 = vld [vmem:[%s6 + $0x68] sm:$0xff]
  %v1344 = vld [vmem:[%s6 + $0x80] sm:$0xff]
  %v1345 = vld [vmem:[%s6 + $0x88] sm:$0xff]
  %v1346 = vld [vmem:[%s6 + $0xa0] sm:$0xff]
  %v1347 = vld [vmem:[%s6 + $0xa8] sm:$0xff]
  %v1348 = vld [vmem:[%s6 + $0xc0] sm:$0xff]
  %v1349 = vld [vmem:[%s6 + $0xc8] sm:$0xff]
  %v1350 = vld [vmem:[%s6 + $0xe0] sm:$0xff]
  %v1351 = vld [vmem:[%s6 + $0xe8] sm:$0xff]
  %v1352 = vld [vmem:[%s6 + $0x100] sm:$0xff]
  %v1353 = vld [vmem:[%s6 + $0x108] sm:$0xff]
  %v1354 = vld [vmem:[%s6 + $0x120] sm:$0xff]
  %v1355 = vld [vmem:[%s6 + $0x128] sm:$0xff]
  %v1356 = vld [vmem:[%s6 + $0x140] sm:$0xff]
  %v1357 = vld [vmem:[%s6 + $0x148] sm:$0xff]
  %v1358 = vld [vmem:[%s6 + $0x160] sm:$0xff]
  %v1359 = vld [vmem:[%s6 + $0x168] sm:$0xff]
  %v1360 = vld [vmem:[%s6 + $0x180] sm:$0xff]
  %v1361 = vld [vmem:[%s6 + $0x188] sm:$0xff]
  %v1362 = vld [vmem:[%s6 + $0x1a0] sm:$0xff]
  %v1363 = vld [vmem:[%s6 + $0x1a8] sm:$0xff]
  %v1364 = vld [vmem:[%s6 + $0x1c0] sm:$0xff]
  %v1365 = vld [vmem:[%s6 + $0x1c8] sm:$0xff]
  %v1366 = vld [vmem:[%s6 + $0x1e0] sm:$0xff]
  %v1367 = vld [vmem:[%s6 + $0x1e8] sm:$0xff]
  %v1368 = vld [vmem:[%s6 + $0x200] sm:$0xff]
  %v1369 = vld [vmem:[%s6 + $0x208] sm:$0xff]
  %s1370 = scalar_lea.vmem %s6, 544
  %v1371 = vld [vmem:[%s1370] ss:$8 sm:$0x3]
  %v1373 = vperm.slane %v1371, 0
  %v1374 = vperm.slane %v1371, 1
  %1377 = vmatpush.msra.mxu0 %v1368
  %1378 = vmatpush.msra.mxu0 %v1366
  %1379 = vmatpush.msra.mxu0 %v1364
  %1380 = vmatpush.msra.mxu0 %v1362
  %1381 = vmatpush.msra.mxu0 %v1360
  %1382 = vmatpush.msra.mxu0 %v1358
  %1383 = vmatpush.msra.mxu0 %v1356
  %1384 = vmatpush.msra.mxu0 %v1354
  %1385 = vmatpush.msra.mxu0 %v1352
  %1386 = vmatpush.msra.mxu0 %v1350
  %1387 = vmatpush.msra.mxu0 %v1348
  %1388 = vmatpush.msra.mxu0 %v1346
  %1389 = vmatpush.msra.mxu0 %v1344
  %1390 = vmatpush.msra.mxu0 %v1342
  %1391 = vmatpush.msra.mxu0 %v1340
  %1392 = vmatpush.msra.mxu0 %v1338
  %1393 = vmatmul.f32.gmra.mxu0 %v1337
  %v1394 = vpop.f32.mrf.mxu0
  %v1395 = vadd.f32 %v1373, %v1394
  %1396 = vdwg.mxu0
  %1397 = vmatpush.msra.mxu0 %v1369
  %1398 = vmatpush.msra.mxu0 %v1367
  %1399 = vmatpush.msra.mxu0 %v1365
  %1400 = vmatpush.msra.mxu0 %v1363
  %1401 = vmatpush.msra.mxu0 %v1361
  %1402 = vmatpush.msra.mxu0 %v1359
  %1403 = vmatpush.msra.mxu0 %v1357
  %1404 = vmatpush.msra.mxu0 %v1355
  %1405 = vmatpush.msra.mxu0 %v1353
  %1406 = vmatpush.msra.mxu0 %v1351
  %1407 = vmatpush.msra.mxu0 %v1349
  %1408 = vmatpush.msra.mxu0 %v1347
  %1409 = vmatpush.msra.mxu0 %v1345
  %1410 = vmatpush.msra.mxu0 %v1343
  %1411 = vmatpush.msra.mxu0 %v1341
  %1412 = vmatpush.msra.mxu0 %v1339
  %1413 = vmatmul.f32.gmra.mxu0 %v1337
  %v1414 = vpop.f32.mrf.mxu0
  %v1415 = vadd.f32 %v1374, %v1414
  %1416 = vdwg.mxu0
  %v1417 = vld [vmem:[%s5 + $0x160] sm:$0xff]
  %v1418 = vld [vmem:[%s5 + $0x168] sm:$0xff]
  %v1419 = vld [vmem:[%s5 + $0x170] sm:$0xff]
  %v1420 = vld [vmem:[%s5 + $0x178] sm:$0xff]
  %v1421 = vld [vmem:[%s5 + $0x180] sm:$0xff]
  %v1422 = vld [vmem:[%s5 + $0x188] sm:$0xff]
  %v1423 = vld [vmem:[%s5 + $0x190] sm:$0xff]
  %v1424 = vld [vmem:[%s5 + $0x198] sm:$0xff]
  %v1425 = vld [vmem:[%s5 + $0x1a0] sm:$0xff]
  %v1426 = vld [vmem:[%s5 + $0x1a8] sm:$0xff]
  %v1427 = vld [vmem:[%s5 + $0x1b0] sm:$0xff]
  %v1428 = vld [vmem:[%s5 + $0x1b8] sm:$0xff]
  %v1429 = vld [vmem:[%s5 + $0x1c0] sm:$0xff]
  %v1430 = vld [vmem:[%s5 + $0x1c8] sm:$0xff]
  %v1431 = vld [vmem:[%s5 + $0x1d0] sm:$0xff]
  %v1432 = vld [vmem:[%s5 + $0x1d8] sm:$0xff]
  %v1433 = vld [vmem:[%s5 + $0x1e0] sm:$0xff]
  %v1434 = vld [vmem:[%s5 + $0x1e8] sm:$0xff]
  %v1435 = vld [vmem:[%s5 + $0x1f0] sm:$0xff]
  %v1436 = vld [vmem:[%s5 + $0x1f8] sm:$0xff]
  %v1437 = vld [vmem:[%s5 + $0x200] sm:$0xff]
  %v1438 = vld [vmem:[%s5 + $0x208] sm:$0xff]
  %v1439 = vld [vmem:[%s5 + $0x210] sm:$0xff]
  %v1440 = vld [vmem:[%s5 + $0x218] sm:$0xff]
  %v1441 = vld [vmem:[%s5 + $0x220] sm:$0xff]
  %v1442 = vld [vmem:[%s5 + $0x228] sm:$0xff]
  %v1443 = vld [vmem:[%s5 + $0x230] sm:$0xff]
  %v1444 = vld [vmem:[%s5 + $0x238] sm:$0xff]
  %v1445 = vld [vmem:[%s5 + $0x240] sm:$0xff]
  %v1446 = vld [vmem:[%s5 + $0x248] sm:$0xff]
  %v1447 = vld [vmem:[%s5 + $0x250] sm:$0xff]
  %v1448 = vld [vmem:[%s5 + $0x258] sm:$0xff]
  %v1449 = vld [vmem:[%s5 + $0x260] sm:$0x1]
  %v1450 = vperm.slane %v1449, 0
  %1451 = vmatpush.msra.mxu0 %v1432
  %1452 = vmatpush.msra.mxu0 %v1431
  %1453 = vmatpush.msra.mxu0 %v1430
  %1454 = vmatpush.msra.mxu0 %v1429
  %1455 = vmatpush.msra.mxu0 %v1428
  %1456 = vmatpush.msra.mxu0 %v1427
  %1457 = vmatpush.msra.mxu0 %v1426
  %1458 = vmatpush.msra.mxu0 %v1425
  %1459 = vmatpush.msra.mxu0 %v1424
  %1460 = vmatpush.msra.mxu0 %v1423
  %1461 = vmatpush.msra.mxu0 %v1422
  %1462 = vmatpush.msra.mxu0 %v1421
  %1463 = vmatpush.msra.mxu0 %v1420
  %1464 = vmatpush.msra.mxu0 %v1419
  %1465 = vmatpush.msra.mxu0 %v1418
  %1466 = vmatpush.msra.mxu0 %v1417
  %1467 = vmatmul.f32.gmra.mxu0 %v1395
  %v1468 = vpop.f32.mrf.mxu0
  %v1469 = vadd.f32 %v1450, %v1468
  %1470 = vdwg.mxu0
  %1471 = vmatpush.msra.mxu0 %v1448
  %1472 = vmatpush.msra.mxu0 %v1447
  %1473 = vmatpush.msra.mxu0 %v1446
  %1474 = vmatpush.msra.mxu0 %v1445
  %1475 = vmatpush.msra.mxu0 %v1444
  %1476 = vmatpush.msra.mxu0 %v1443
  %1477 = vmatpush.msra.mxu0 %v1442
  %1478 = vmatpush.msra.mxu0 %v1441
  %1479 = vmatpush.msra.mxu0 %v1440
  %1480 = vmatpush.msra.mxu0 %v1439
  %1481 = vmatpush.msra.mxu0 %v1438
  %1482 = vmatpush.msra.mxu0 %v1437
  %1483 = vmatpush.msra.mxu0 %v1436
  %1484 = vmatpush.msra.mxu0 %v1435
  %1485 = vmatpush.msra.mxu0 %v1434
  %1486 = vmatpush.msra.mxu0 %v1433
  %1487 = vmatmul.f32.gmra.mxu0 %v1415
  %v1488 = vpop.f32.mrf.mxu0
  %v1489 = vadd.f32 %v1469, %v1488
  %1490 = vdwg.mxu0
  %v1491 = vmul.f32 %v1489, %v1489
  %v1492 = vmul.f32 %v1489, %v1491
  %v1493 = vmul.f32 %v1492, 0.044715
  %v1494 = vadd.f32 %v1489, %v1493
  %v1495 = vmul.f32 %v1494, 0.7978846
  %v1496 = vtanh.pop %v1495
  %v1497 = vadd.f32 %v1496, 1.0
  %v1498 = vmul.f32 %v1497, 0.5
  %v1499 = vmul.f32 %v1489, %v1498
  %vm1500 = vcmask 15360
  %v1501 = vsel %vm1500, %v1499, -inf
  %1502 = vmax.xlane.f32.xlu0 %v1501
  %v1503 = vpop.xlane.xlu0 %1502
  %v1504 = vsub.f32 %v1499, %v1503
  %v1505 = vmul.f32 %v1504, 1.442695
  %v1506 = vpow.pop %v1505
  %v1507 = vsel %vm1500, %v1506, 0.0
  %1508 = vadd.xlane.f32.xlu0 %v1507
  %v1509 = vpop.xlane.xlu0 %1508
  %v1510 = vlog2.pop %v1509
  %v1511 = vmul.f32 %v1510, 0.6931472
  %v1512 = vadd.f32 %v1511, %v1503
  %v1513 = vsub.f32 %v1499, %v1512
  %1514 = vst.msk [vmem:[%s8] sm:$0xff] %vm1500, %v1513
  // Predicated region
  $region30: #{prescription_pill_forward.1} parent=0 // pred_check
    _
  $region31: #{prescription_pill_forward.1} parent=0 // pred_check_branch
    %1516 = sbr.rel (0) target = $region33
  $region32: #{prescription_pill_forward.1} parent=0 // pred_region
    _
  $region33: #{prescription_pill_forward.1} parent=0 // pred_fallthru
    _
  // Predicated region
  $region34: #{prescription_pill_forward.1} parent=0 // pred_check
    _
  $region35: #{prescription_pill_forward.1} parent=0 // pred_check_branch
    %1518 = sbr.rel (0) target = $region37
  $region36: #{prescription_pill_forward.1} parent=0 // pred_region
    _
  $region37: #{prescription_pill_forward.1} parent=0 // pred_fallthru
    _
  // Predicated region
  $region38: #{prescription_pill_forward.1} parent=0 // pred_check
    _
  $region39: #{prescription_pill_forward.1} parent=0 // pred_check_branch
    %1520 = sbr.rel (0) target = $region41
  $region40: #{prescription_pill_forward.1} parent=0 // pred_region
    _
  $region41: #{prescription_pill_forward.1} parent=0 // pred_fallthru
    _
  // Predicated region
  $region42: #{prescription_pill_forward.1} parent=0 // pred_check
    _
  $region43: #{prescription_pill_forward.1} parent=0 // pred_check_branch
    %1522 = sbr.rel (0) target = $region45
  $region44: #{prescription_pill_forward.1} parent=0 // pred_region
    _
  $region45: #{prescription_pill_forward.1} parent=0 // pred_fallthru
    _

</llo_original>
